<compile_context>
chip_gen: v7x
topology: tpu7x:2x2x1
jax: 0.10.0
libtpu: 0.0.40
codegen_flags: <defaults>
</compile_context>

<pallas_src>
import functools

import jax
import jax.numpy as jnp
from jax import lax
from jax.experimental import pallas as pl
from jax.experimental.pallas import tpu as pltpu


_MASK_VALUE = -0.7 * float(jnp.finfo(jnp.float32).max)


def _mhsa_kernel(x_ref, wq_ref, wk_ref, o_ref, k_scr, *, nhead, scale, tq, n_valid):
    # x_ref:  (bb, Np, C)  bf16, full (padded) sequences of this batch block
    # wq_ref: (C, C)       bf16 q projection weights (y = x @ W^T)
    # wk_ref: (C, C)       bf16 k projection weights (also used for v, as in module)
    # o_ref:  (bb, tq, C)  lane-dense output block for (batch block, q-tile)
    # k_scr:  (bb, Np, C)  bf16 persistent K scratch (computed once per batch)
    bb_size, n_pad, C = x_ref.shape
    dh = C // nhead
    qi = pl.program_id(1)
    # Contract the last dims (== x @ W^T / q @ k^T) without materialized transposes.
    dn_nt = (((1,), (1,)), ((), ()))

    # K (== V) projection: once per batch block, reused for every q-tile.
    @pl.when(qi == 0)
    def _():
        wk = wk_ref[...]
        for b in range(bb_size):
            kb = lax.dot_general(x_ref[b], wk, dn_nt,
                                 preferred_element_type=jnp.float32)   # (Np, C)
            k_scr[b] = kb.astype(jnp.bfloat16)

    q_start = pl.multiple_of(qi * tq, tq)
    wq = wq_ref[...]
    for b in range(bb_size):
        x_q = x_ref[b, pl.ds(q_start, tq), :]                          # (tq, C) bf16
        q = lax.dot_general(x_q, wq, dn_nt,
                            preferred_element_type=jnp.float32)        # (tq, C) f32
        # Fold the softmax scale into q (nhead-fold fewer VPU multiplies than on s).
        q = (q * scale).astype(jnp.bfloat16)
        k = k_scr[b]                                                   # (Np, C) bf16; v == k

        for h in range(nhead):
            sl = slice(h * dh, (h + 1) * dh)
            qh = q[:, sl]                                              # (tq, dh)
            kh = k[:, sl]                                              # (Np, dh)

            # s = q_h @ k_h^T
            s = lax.dot_general(qh, kh, dn_nt,
                                preferred_element_type=jnp.float32)    # (tq, Np)
            if n_valid < n_pad:
                # Mask out padded keys (wrapper zero-pads N up to a tile multiple).
                kid = lax.broadcasted_iota(jnp.int32, s.shape, 1)
                s = jnp.where(kid < n_valid, s, _MASK_VALUE)

            # Numerically-stable softmax over keys.
            s = s - jnp.max(s, axis=-1, keepdims=True)
            p = jnp.exp(s)
            p = p * pl.reciprocal(jnp.sum(p, axis=-1, keepdims=True), approx=True)

            # o_h = p @ v_h  (v_h == k_h); write directly into the lane-dense
            # VMEM output block at this head's column slice (no concat).
            oh = jnp.dot(p.astype(jnp.bfloat16), kh,
                         preferred_element_type=jnp.float32)           # (tq, dh)
            o_ref[b, :, sl] = oh.astype(o_ref.dtype)


def _pick_batch_block(B, N, C):
    """Fold several batches per program when the per-batch block is tiny."""
    if N * C > 128 * 128:
        return 1
    for cand in range(min(B, 8), 0, -1):
        if B % cand == 0:
            return cand
    return 1


def mhsa_pallas(x, wq, wk, nhead):
    """Multi-head self-attention forward. x: (B, N, C); wq, wk: (C, C)."""
    B, N, C = x.shape
    assert C % nhead == 0, "d_model must be divisible by nhead"
    scale = float(C) ** (-0.5)
    out_dtype = x.dtype

    # bf16 HBM-side operands (halves DMA + VMEM); fp32 accumulation in-kernel.
    x_bf = x.astype(jnp.bfloat16)
    wq_bf = wq.astype(jnp.bfloat16)
    wk_bf = wk.astype(jnp.bfloat16)

    # Query tiling: one full-N step for short sequences; 256-row tiles (with
    # padding + key masking) for long ones so per-head scores stay (256, Npad).
    TQ = 256
    if N <= 512:
        tq = N
        n_pad = N
    else:
        tq = TQ
        n_pad = TQ * pl.cdiv(N, TQ)
        if n_pad != N:
            x_bf = jnp.pad(x_bf, ((0, 0), (0, n_pad - N), (0, 0)))
    num_q = n_pad // tq

    bb = _pick_batch_block(B, N, C) if num_q == 1 else 1
    num_b = B // bb

    kernel = functools.partial(_mhsa_kernel, nhead=nhead, scale=scale,
                               tq=tq, n_valid=N)

    # VMEM working set (bf16 blocks + scratch + in-kernel temporaries),
    # capped at 48 MiB so it also fits v7x's 64 MiB/core with headroom.
    f32_b, bf16_b = 4, 2
    out_b = jnp.dtype(out_dtype).itemsize
    dh = C // nhead
    est = (
        2 * bb * n_pad * C * bf16_b          # x blocks (double buffered)
        + 2 * 2 * C * C * bf16_b             # Wq, Wk blocks (double buffered)
        + 2 * bb * tq * C * out_b            # output blocks (double buffered)
        + bb * n_pad * C * bf16_b            # persistent K scratch
        + n_pad * C * f32_b                  # fp32 K temp at qi == 0
        + tq * C * (f32_b + bf16_b)          # q fp32 + bf16
        + 2 * tq * n_pad * f32_b             # per-head scores / probs
        + tq * dh * f32_b                    # per-head output
    )
    vmem_limit = int(min(48 * 1024 * 1024, max(16 * 1024 * 1024, 2 * est)))

    cost = pl.CostEstimate(
        flops=2 * B * (2 * N * C * C + 2 * N * N * C),
        transcendentals=B * nhead * N * N,
        bytes_accessed=B * N * C * (bf16_b + out_b) + 2 * C * C * bf16_b,
    )

    out = pl.pallas_call(
        kernel,
        out_shape=jax.ShapeDtypeStruct((B, n_pad, C), out_dtype),
        grid_spec=pltpu.PrefetchScalarGridSpec(
            num_scalar_prefetch=0,
            grid=(num_b, num_q),
            in_specs=[
                # full (padded) sequences of this batch block; queries sliced in-kernel
                pl.BlockSpec((bb, n_pad, C), lambda b, qi: (b, 0, 0)),
                pl.BlockSpec((C, C), lambda b, qi: (0, 0)),
                pl.BlockSpec((C, C), lambda b, qi: (0, 0)),
            ],
            out_specs=pl.BlockSpec((bb, tq, C), lambda b, qi: (b, qi, 0)),
            scratch_shapes=[pltpu.VMEM((bb, n_pad, C), jnp.bfloat16)],
        ),
        compiler_params=pltpu.CompilerParams(
            # batch axis parallel (megacore on v7x); q-tile axis must stay
            # "arbitrary" because the K scratch is initialised at qi == 0.
            dimension_semantics=("parallel", "arbitrary"),
            vmem_limit_bytes=vmem_limit,
        ),
        cost_estimate=cost,
    )(x_bf, wq_bf, wk_bf)

    if n_pad != N:
        out = out[:, :N, :]
    return out  # (B, N, C), lane-dense: no wrapper transpose/reshape needed


def mhsa_reference(x, wq, wk, nhead):
    """Pure-JAX (fp32) reference mirroring the PyTorch forward exactly."""
    B, N, C = x.shape
    dh = C // nhead
    q = (x @ wq.T).reshape(B, N, nhead, dh).transpose(0, 2, 1, 3)
    k = (x @ wk.T).reshape(B, N, nhead, dh).transpose(0, 2, 1, 3)
    v = (x @ wk.T).reshape(B, N, nhead, dh).transpose(0, 2, 1, 3)  # v = k(x)
    attn = (q @ k.transpose(0, 1, 3, 2)) * (C ** -0.5)
    attn = jax.nn.softmax(attn, axis=-1)
    out = (attn @ v).transpose(0, 2, 1, 3).reshape(B, N, C)
    return out


if __name__ == "__main__":
    B, N, C, nhead = 2, 8, 32, 4

    key = jax.random.PRNGKey(0)
    kx, kq, kk, kv = jax.random.split(key, 4)

    x = jax.random.normal(kx, (B, N, C), dtype=jnp.float32)
    # nn.Linear(d_model, d_model, bias=False) weights: shape (C, C), y = x @ W.T
    wq = jax.random.normal(kq, (C, C), dtype=jnp.float32) * 0.1
    wk = jax.random.normal(kk, (C, C), dtype=jnp.float32) * 0.1
    wv = jax.random.normal(kv, (C, C), dtype=jnp.float32) * 0.1  # unused (matches module)

    out = mhsa_pallas(x, wq, wk, nhead)
    out = jax.block_until_ready(out)

    ref = mhsa_reference(x, wq, wk, nhead)
    assert out.shape == (B, N, C)
    # bf16 operands (fp32 accumulation) + approx reciprocal vs a pure-fp32
    # reference: allow a modest tolerance.
    max_err = float(jnp.max(jnp.abs(out - ref)))
    assert max_err < 5e-2, f"mismatch vs reference, max |err| = {max_err}"

    print("KERNEL_OK")
</pallas_src>

<mosaic_0001>
module attributes {stable_mosaic.version = 11 : i64} {
  func.func @_mhsa_kernel(%arg0: i32, %arg1: i32, %arg2: memref<2x8x32xbf16, #tpu.memory_space<vmem>>, %arg3: memref<32x32xbf16, #tpu.memory_space<vmem>>, %arg4: memref<32x32xbf16, #tpu.memory_space<vmem>>, %arg5: memref<2x8x32xf32, #tpu.memory_space<vmem>>, %arg6: memref<2x8x32xbf16, #tpu.memory_space<vmem>>) attributes {dimension_semantics = [#tpu.dimension_semantics<parallel>, #tpu.dimension_semantics<arbitrary>], iteration_bounds = array<i64: 1, 1>, scalar_prefetch = 0 : i64, scratch_operands = 1 : i64, tpu.core_type = #tpu.core_type<tc>, window_params = [{transform_indices = @transform_0, window_bounds = array<i64: 2, 8, 32>}, {pipeline_mode = #tpu.pipeline_mode<synchronous>, transform_indices = @transform_1, window_bounds = array<i64: 32, 32>}, {pipeline_mode = #tpu.pipeline_mode<synchronous>, transform_indices = @transform_2, window_bounds = array<i64: 32, 32>}, {transform_indices = @transform_3, window_bounds = array<i64: 2, 8, 32>}]} {
    %c0_i32 = arith.constant 0 : i32
    %0 = arith.cmpi eq, %arg1, %c0_i32 : i32
    %1 = arith.extui %0 : i1 to i32
    %c0_i32_0 = arith.constant 0 : i32
    %2 = arith.cmpi ne, %1, %c0_i32_0 : i32
    scf.if %2 {
      %c0_67 = arith.constant 0 : index
      %c0_68 = arith.constant 0 : index
      %168 = vector.load %arg4[%c0_67, %c0_68] : memref<32x32xbf16, #tpu.memory_space<vmem>>, vector<32x32xbf16>
      %c0_69 = arith.constant 0 : index
      %c0_70 = arith.constant 0 : index
      %c0_71 = arith.constant 0 : index
      %169 = vector.load %arg2[%c0_69, %c0_70, %c0_71] : memref<2x8x32xbf16, #tpu.memory_space<vmem>>, vector<1x8x32xbf16>
      %170 = vector.shape_cast %169 : vector<1x8x32xbf16> to vector<8x32xbf16>
      %cst_72 = arith.constant dense<0.000000e+00> : vector<8x32xf32>
      %171 = tpu.matmul %170, %168, %cst_72 {dimension_numbers = #tpu.dot_dimension_numbers<[1], [1], [0], [0], [0, 0, 1, 0], [], []>} : vector<8x32xbf16>, vector<32x32xbf16>, vector<8x32xf32> -> vector<8x32xf32>
      %172 = arith.truncf %171 : vector<8x32xf32> to vector<8x32xbf16>
      %c0_73 = arith.constant 0 : index
      %c0_74 = arith.constant 0 : index
      %c0_75 = arith.constant 0 : index
      %173 = vector.load %arg6[%c0_73, %c0_74, %c0_75] : memref<2x8x32xbf16, #tpu.memory_space<vmem>>, vector<1x8x32xbf16>
      %174 = vector.shape_cast %173 : vector<1x8x32xbf16> to vector<8x32xbf16>
      %175 = vector.shape_cast %172 : vector<8x32xbf16> to vector<1x8x32xbf16>
      tpu.vector_store %arg6[%c0_73, %c0_74, %c0_75], %175 {strides = array<i32>} : memref<2x8x32xbf16, #tpu.memory_space<vmem>>, vector<1x8x32xbf16>,
      %c1_76 = arith.constant 1 : index
      %c0_77 = arith.constant 0 : index
      %c0_78 = arith.constant 0 : index
      %176 = vector.load %arg2[%c1_76, %c0_77, %c0_78] : memref<2x8x32xbf16, #tpu.memory_space<vmem>>, vector<1x8x32xbf16>
      %177 = vector.shape_cast %176 : vector<1x8x32xbf16> to vector<8x32xbf16>
      %cst_79 = arith.constant dense<0.000000e+00> : vector<8x32xf32>
      %178 = tpu.matmul %177, %168, %cst_79 {dimension_numbers = #tpu.dot_dimension_numbers<[1], [1], [0], [0], [0, 0, 1, 0], [], []>} : vector<8x32xbf16>, vector<32x32xbf16>, vector<8x32xf32> -> vector<8x32xf32>
      %179 = arith.truncf %178 : vector<8x32xf32> to vector<8x32xbf16>
      %c1_80 = arith.constant 1 : index
      %c0_81 = arith.constant 0 : index
      %c0_82 = arith.constant 0 : index
      %180 = vector.load %arg6[%c1_80, %c0_81, %c0_82] : memref<2x8x32xbf16, #tpu.memory_space<vmem>>, vector<1x8x32xbf16>
      %181 = vector.shape_cast %180 : vector<1x8x32xbf16> to vector<8x32xbf16>
      %182 = vector.shape_cast %179 : vector<8x32xbf16> to vector<1x8x32xbf16>
      tpu.vector_store %arg6[%c1_80, %c0_81, %c0_82], %182 {strides = array<i32>} : memref<2x8x32xbf16, #tpu.memory_space<vmem>>, vector<1x8x32xbf16>,
    } else {
    }
    %c8_i32 = arith.constant 8 : i32
    %3 = arith.muli %arg1, %c8_i32 : i32
    %4 = tpu.assume_multiple %3, 8 : i32
    %c0 = arith.constant 0 : index
    %c0_1 = arith.constant 0 : index
    %5 = vector.load %arg3[%c0, %c0_1] : memref<32x32xbf16, #tpu.memory_space<vmem>>, vector<32x32xbf16>
    %c0_2 = arith.constant 0 : index
    %6 = arith.index_cast %4 : i32 to index
    %c0_3 = arith.constant 0 : index
    %7 = vector.load %arg2[%c0_2, %6, %c0_3] : memref<2x8x32xbf16, #tpu.memory_space<vmem>>, vector<1x8x32xbf16>
    %8 = vector.shape_cast %7 : vector<1x8x32xbf16> to vector<8x32xbf16>
    %cst = arith.constant dense<0.000000e+00> : vector<8x32xf32>
    %9 = tpu.matmul %8, %5, %cst {dimension_numbers = #tpu.dot_dimension_numbers<[1], [1], [0], [0], [0, 0, 1, 0], [], []>} : vector<8x32xbf16>, vector<32x32xbf16>, vector<8x32xf32> -> vector<8x32xf32>
    %cst_4 = arith.constant 0.176776692 : f32
    %10 = vector.broadcast %cst_4 : f32 to vector<8x32xf32>
    %11 = arith.mulf %9, %10 : vector<8x32xf32>
    %12 = arith.truncf %11 : vector<8x32xf32> to vector<8x32xbf16>
    %c0_5 = arith.constant 0 : index
    %c0_6 = arith.constant 0 : index
    %c0_7 = arith.constant 0 : index
    %13 = vector.load %arg6[%c0_5, %c0_6, %c0_7] : memref<2x8x32xbf16, #tpu.memory_space<vmem>>, vector<1x8x32xbf16>
    %14 = vector.shape_cast %13 : vector<1x8x32xbf16> to vector<8x32xbf16>
    %15 = vector.extract_strided_slice %12 {offsets = [0, 0], sizes = [8, 8], strides = [1, 1]} : vector<8x32xbf16> to vector<8x8xbf16>
    %16 = vector.extract_strided_slice %14 {offsets = [0, 0], sizes = [8, 8], strides = [1, 1]} : vector<8x32xbf16> to vector<8x8xbf16>
    %cst_8 = arith.constant dense<0.000000e+00> : vector<8x8xf32>
    %17 = tpu.matmul %15, %16, %cst_8 {dimension_numbers = #tpu.dot_dimension_numbers<[1], [1], [0], [0], [0, 0, 1, 0], [], []>} : vector<8x8xbf16>, vector<8x8xbf16>, vector<8x8xf32> -> vector<8x8xf32>
    %cst_9 = arith.constant dense<0xFF800000> : vector<8xf32>
    %18 = vector.multi_reduction <maximumf>, %17, %cst_9 [1] : vector<8x8xf32> to vector<8xf32>
    %19 = vector.shape_cast %18 : vector<8xf32> to vector<8x1xf32>
    %20 = vector.broadcast %19 : vector<8x1xf32> to vector<8x8xf32>
    %21 = arith.subf %17, %20 : vector<8x8xf32>
    %22 = math.exp %21 : vector<8x8xf32>
    %cst_10 = arith.constant dense<0.000000e+00> : vector<8xf32>
    %23 = vector.multi_reduction <add>, %22, %cst_10 [1] : vector<8x8xf32> to vector<8xf32>
    %24 = vector.shape_cast %23 : vector<8xf32> to vector<8x1xf32>
    %25 = tpu.reciprocal %24 {approx = true} : vector<8x1xf32> -> vector<8x1xf32>
    %26 = vector.broadcast %25 : vector<8x1xf32> to vector<8x8xf32>
    %27 = arith.mulf %22, %26 : vector<8x8xf32>
    %28 = arith.truncf %27 : vector<8x8xf32> to vector<8x8xbf16>
    %cst_11 = arith.constant dense<0.000000e+00> : vector<8x8xf32>
    %29 = tpu.matmul %28, %16, %cst_11 {dimension_numbers = #tpu.dot_dimension_numbers<[1], [0], [0], [1], [0, 0, 1, 1], [], []>} : vector<8x8xbf16>, vector<8x8xbf16>, vector<8x8xf32> -> vector<8x8xf32>
    %c0_12 = arith.constant 0 : index
    %c0_13 = arith.constant 0 : index
    %c0_14 = arith.constant 0 : index
    %30 = vector.load %arg5[%c0_12, %c0_13, %c0_14] : memref<2x8x32xf32, #tpu.memory_space<vmem>>, vector<1x8x8xf32>
    %31 = vector.shape_cast %30 : vector<1x8x8xf32> to vector<8x8xf32>
    %32 = vector.shape_cast %29 : vector<8x8xf32> to vector<1x8x8xf32>
    tpu.vector_store %arg5[%c0_12, %c0_13, %c0_14], %32 {strides = array<i32>} : memref<2x8x32xf32, #tpu.memory_space<vmem>>, vector<1x8x8xf32>,
    %33 = vector.extract_strided_slice %12 {offsets = [0, 8], sizes = [8, 8], strides = [1, 1]} : vector<8x32xbf16> to vector<8x8xbf16>
    %34 = vector.extract_strided_slice %14 {offsets = [0, 8], sizes = [8, 8], strides = [1, 1]} : vector<8x32xbf16> to vector<8x8xbf16>
    %cst_15 = arith.constant dense<0.000000e+00> : vector<8x8xf32>
    %35 = tpu.matmul %33, %34, %cst_15 {dimension_numbers = #tpu.dot_dimension_numbers<[1], [1], [0], [0], [0, 0, 1, 0], [], []>} : vector<8x8xbf16>, vector<8x8xbf16>, vector<8x8xf32> -> vector<8x8xf32>
    %cst_16 = arith.constant dense<0xFF800000> : vector<8xf32>
    %36 = vector.multi_reduction <maximumf>, %35, %cst_16 [1] : vector<8x8xf32> to vector<8xf32>
    %37 = vector.shape_cast %36 : vector<8xf32> to vector<8x1xf32>
    %38 = vector.broadcast %37 : vector<8x1xf32> to vector<8x8xf32>
    %39 = arith.subf %35, %38 : vector<8x8xf32>
    %40 = math.exp %39 : vector<8x8xf32>
    %cst_17 = arith.constant dense<0.000000e+00> : vector<8xf32>
    %41 = vector.multi_reduction <add>, %40, %cst_17 [1] : vector<8x8xf32> to vector<8xf32>
    %42 = vector.shape_cast %41 : vector<8xf32> to vector<8x1xf32>
    %43 = tpu.reciprocal %42 {approx = true} : vector<8x1xf32> -> vector<8x1xf32>
    %44 = vector.broadcast %43 : vector<8x1xf32> to vector<8x8xf32>
    %45 = arith.mulf %40, %44 : vector<8x8xf32>
    %46 = arith.truncf %45 : vector<8x8xf32> to vector<8x8xbf16>
    %cst_18 = arith.constant dense<0.000000e+00> : vector<8x8xf32>
    %47 = tpu.matmul %46, %34, %cst_18 {dimension_numbers = #tpu.dot_dimension_numbers<[1], [0], [0], [1], [0, 0, 1, 1], [], []>} : vector<8x8xbf16>, vector<8x8xbf16>, vector<8x8xf32> -> vector<8x8xf32>
    %c0_19 = arith.constant 0 : index
    %c0_20 = arith.constant 0 : index
    %c8 = arith.constant 8 : index
    %48 = vector.load %arg5[%c0_19, %c0_20, %c8] : memref<2x8x32xf32, #tpu.memory_space<vmem>>, vector<1x8x8xf32>
    %49 = vector.shape_cast %48 : vector<1x8x8xf32> to vector<8x8xf32>
    %50 = vector.shape_cast %47 : vector<8x8xf32> to vector<1x8x8xf32>
    tpu.vector_store %arg5[%c0_19, %c0_20, %c8], %50 {strides = array<i32>} : memref<2x8x32xf32, #tpu.memory_space<vmem>>, vector<1x8x8xf32>,
    %51 = vector.extract_strided_slice %12 {offsets = [0, 16], sizes = [8, 8], strides = [1, 1]} : vector<8x32xbf16> to vector<8x8xbf16>
    %52 = vector.extract_strided_slice %14 {offsets = [0, 16], sizes = [8, 8], strides = [1, 1]} : vector<8x32xbf16> to vector<8x8xbf16>
    %cst_21 = arith.constant dense<0.000000e+00> : vector<8x8xf32>
    %53 = tpu.matmul %51, %52, %cst_21 {dimension_numbers = #tpu.dot_dimension_numbers<[1], [1], [0], [0], [0, 0, 1, 0], [], []>} : vector<8x8xbf16>, vector<8x8xbf16>, vector<8x8xf32> -> vector<8x8xf32>
    %cst_22 = arith.constant dense<0xFF800000> : vector<8xf32>
    %54 = vector.multi_reduction <maximumf>, %53, %cst_22 [1] : vector<8x8xf32> to vector<8xf32>
    %55 = vector.shape_cast %54 : vector<8xf32> to vector<8x1xf32>
    %56 = vector.broadcast %55 : vector<8x1xf32> to vector<8x8xf32>
    %57 = arith.subf %53, %56 : vector<8x8xf32>
    %58 = math.exp %57 : vector<8x8xf32>
    %cst_23 = arith.constant dense<0.000000e+00> : vector<8xf32>
    %59 = vector.multi_reduction <add>, %58, %cst_23 [1] : vector<8x8xf32> to vector<8xf32>
    %60 = vector.shape_cast %59 : vector<8xf32> to vector<8x1xf32>
    %61 = tpu.reciprocal %60 {approx = true} : vector<8x1xf32> -> vector<8x1xf32>
    %62 = vector.broadcast %61 : vector<8x1xf32> to vector<8x8xf32>
    %63 = arith.mulf %58, %62 : vector<8x8xf32>
    %64 = arith.truncf %63 : vector<8x8xf32> to vector<8x8xbf16>
    %cst_24 = arith.constant dense<0.000000e+00> : vector<8x8xf32>
    %65 = tpu.matmul %64, %52, %cst_24 {dimension_numbers = #tpu.dot_dimension_numbers<[1], [0], [0], [1], [0, 0, 1, 1], [], []>} : vector<8x8xbf16>, vector<8x8xbf16>, vector<8x8xf32> -> vector<8x8xf32>
    %c0_25 = arith.constant 0 : index
    %c0_26 = arith.constant 0 : index
    %c16 = arith.constant 16 : index
    %66 = vector.load %arg5[%c0_25, %c0_26, %c16] : memref<2x8x32xf32, #tpu.memory_space<vmem>>, vector<1x8x8xf32>
    %67 = vector.shape_cast %66 : vector<1x8x8xf32> to vector<8x8xf32>
    %68 = vector.shape_cast %65 : vector<8x8xf32> to vector<1x8x8xf32>
    tpu.vector_store %arg5[%c0_25, %c0_26, %c16], %68 {strides = array<i32>} : memref<2x8x32xf32, #tpu.memory_space<vmem>>, vector<1x8x8xf32>,
    %69 = vector.extract_strided_slice %12 {offsets = [0, 24], sizes = [8, 8], strides = [1, 1]} : vector<8x32xbf16> to vector<8x8xbf16>
    %70 = vector.extract_strided_slice %14 {offsets = [0, 24], sizes = [8, 8], strides = [1, 1]} : vector<8x32xbf16> to vector<8x8xbf16>
    %cst_27 = arith.constant dense<0.000000e+00> : vector<8x8xf32>
    %71 = tpu.matmul %69, %70, %cst_27 {dimension_numbers = #tpu.dot_dimension_numbers<[1], [1], [0], [0], [0, 0, 1, 0], [], []>} : vector<8x8xbf16>, vector<8x8xbf16>, vector<8x8xf32> -> vector<8x8xf32>
    %cst_28 = arith.constant dense<0xFF800000> : vector<8xf32>
    %72 = vector.multi_reduction <maximumf>, %71, %cst_28 [1] : vector<8x8xf32> to vector<8xf32>
    %73 = vector.shape_cast %72 : vector<8xf32> to vector<8x1xf32>
    %74 = vector.broadcast %73 : vector<8x1xf32> to vector<8x8xf32>
    %75 = arith.subf %71, %74 : vector<8x8xf32>
    %76 = math.exp %75 : vector<8x8xf32>
    %cst_29 = arith.constant dense<0.000000e+00> : vector<8xf32>
    %77 = vector.multi_reduction <add>, %76, %cst_29 [1] : vector<8x8xf32> to vector<8xf32>
    %78 = vector.shape_cast %77 : vector<8xf32> to vector<8x1xf32>
    %79 = tpu.reciprocal %78 {approx = true} : vector<8x1xf32> -> vector<8x1xf32>
    %80 = vector.broadcast %79 : vector<8x1xf32> to vector<8x8xf32>
    %81 = arith.mulf %76, %80 : vector<8x8xf32>
    %82 = arith.truncf %81 : vector<8x8xf32> to vector<8x8xbf16>
    %cst_30 = arith.constant dense<0.000000e+00> : vector<8x8xf32>
    %83 = tpu.matmul %82, %70, %cst_30 {dimension_numbers = #tpu.dot_dimension_numbers<[1], [0], [0], [1], [0, 0, 1, 1], [], []>} : vector<8x8xbf16>, vector<8x8xbf16>, vector<8x8xf32> -> vector<8x8xf32>
    %c0_31 = arith.constant 0 : index
    %c0_32 = arith.constant 0 : index
    %c24 = arith.constant 24 : index
    %84 = vector.load %arg5[%c0_31, %c0_32, %c24] : memref<2x8x32xf32, #tpu.memory_space<vmem>>, vector<1x8x8xf32>
    %85 = vector.shape_cast %84 : vector<1x8x8xf32> to vector<8x8xf32>
    %86 = vector.shape_cast %83 : vector<8x8xf32> to vector<1x8x8xf32>
    tpu.vector_store %arg5[%c0_31, %c0_32, %c24], %86 {strides = array<i32>} : memref<2x8x32xf32, #tpu.memory_space<vmem>>, vector<1x8x8xf32>,
    %c1 = arith.constant 1 : index
    %87 = arith.index_cast %4 : i32 to index
    %c0_33 = arith.constant 0 : index
    %88 = vector.load %arg2[%c1, %87, %c0_33] : memref<2x8x32xbf16, #tpu.memory_space<vmem>>, vector<1x8x32xbf16>
    %89 = vector.shape_cast %88 : vector<1x8x32xbf16> to vector<8x32xbf16>
    %cst_34 = arith.constant dense<0.000000e+00> : vector<8x32xf32>
    %90 = tpu.matmul %89, %5, %cst_34 {dimension_numbers = #tpu.dot_dimension_numbers<[1], [1], [0], [0], [0, 0, 1, 0], [], []>} : vector<8x32xbf16>, vector<32x32xbf16>, vector<8x32xf32> -> vector<8x32xf32>
    %cst_35 = arith.constant 0.176776692 : f32
    %91 = vector.broadcast %cst_35 : f32 to vector<8x32xf32>
    %92 = arith.mulf %90, %91 : vector<8x32xf32>
    %93 = arith.truncf %92 : vector<8x32xf32> to vector<8x32xbf16>
    %c1_36 = arith.constant 1 : index
    %c0_37 = arith.constant 0 : index
    %c0_38 = arith.constant 0 : index
    %94 = vector.load %arg6[%c1_36, %c0_37, %c0_38] : memref<2x8x32xbf16, #tpu.memory_space<vmem>>, vector<1x8x32xbf16>
    %95 = vector.shape_cast %94 : vector<1x8x32xbf16> to vector<8x32xbf16>
    %96 = vector.extract_strided_slice %93 {offsets = [0, 0], sizes = [8, 8], strides = [1, 1]} : vector<8x32xbf16> to vector<8x8xbf16>
    %97 = vector.extract_strided_slice %95 {offsets = [0, 0], sizes = [8, 8], strides = [1, 1]} : vector<8x32xbf16> to vector<8x8xbf16>
    %cst_39 = arith.constant dense<0.000000e+00> : vector<8x8xf32>
    %98 = tpu.matmul %96, %97, %cst_39 {dimension_numbers = #tpu.dot_dimension_numbers<[1], [1], [0], [0], [0, 0, 1, 0], [], []>} : vector<8x8xbf16>, vector<8x8xbf16>, vector<8x8xf32> -> vector<8x8xf32>
    %cst_40 = arith.constant dense<0xFF800000> : vector<8xf32>
    %99 = vector.multi_reduction <maximumf>, %98, %cst_40 [1] : vector<8x8xf32> to vector<8xf32>
    %100 = vector.shape_cast %99 : vector<8xf32> to vector<8x1xf32>
    %101 = vector.broadcast %100 : vector<8x1xf32> to vector<8x8xf32>
    %102 = arith.subf %98, %101 : vector<8x8xf32>
    %103 = math.exp %102 : vector<8x8xf32>
    %cst_41 = arith.constant dense<0.000000e+00> : vector<8xf32>
    %104 = vector.multi_reduction <add>, %103, %cst_41 [1] : vector<8x8xf32> to vector<8xf32>
    %105 = vector.shape_cast %104 : vector<8xf32> to vector<8x1xf32>
    %106 = tpu.reciprocal %105 {approx = true} : vector<8x1xf32> -> vector<8x1xf32>
    %107 = vector.broadcast %106 : vector<8x1xf32> to vector<8x8xf32>
    %108 = arith.mulf %103, %107 : vector<8x8xf32>
    %109 = arith.truncf %108 : vector<8x8xf32> to vector<8x8xbf16>
    %cst_42 = arith.constant dense<0.000000e+00> : vector<8x8xf32>
    %110 = tpu.matmul %109, %97, %cst_42 {dimension_numbers = #tpu.dot_dimension_numbers<[1], [0], [0], [1], [0, 0, 1, 1], [], []>} : vector<8x8xbf16>, vector<8x8xbf16>, vector<8x8xf32> -> vector<8x8xf32>
    %c1_43 = arith.constant 1 : index
    %c0_44 = arith.constant 0 : index
    %c0_45 = arith.constant 0 : index
    %111 = vector.load %arg5[%c1_43, %c0_44, %c0_45] : memref<2x8x32xf32, #tpu.memory_space<vmem>>, vector<1x8x8xf32>
    %112 = vector.shape_cast %111 : vector<1x8x8xf32> to vector<8x8xf32>
    %113 = vector.shape_cast %110 : vector<8x8xf32> to vector<1x8x8xf32>
    tpu.vector_store %arg5[%c1_43, %c0_44, %c0_45], %113 {strides = array<i32>} : memref<2x8x32xf32, #tpu.memory_space<vmem>>, vector<1x8x8xf32>,
    %114 = vector.extract_strided_slice %93 {offsets = [0, 8], sizes = [8, 8], strides = [1, 1]} : vector<8x32xbf16> to vector<8x8xbf16>
    %115 = vector.extract_strided_slice %95 {offsets = [0, 8], sizes = [8, 8], strides = [1, 1]} : vector<8x32xbf16> to vector<8x8xbf16>
    %cst_46 = arith.constant dense<0.000000e+00> : vector<8x8xf32>
    %116 = tpu.matmul %114, %115, %cst_46 {dimension_numbers = #tpu.dot_dimension_numbers<[1], [1], [0], [0], [0, 0, 1, 0], [], []>} : vector<8x8xbf16>, vector<8x8xbf16>, vector<8x8xf32> -> vector<8x8xf32>
    %cst_47 = arith.constant dense<0xFF800000> : vector<8xf32>
    %117 = vector.multi_reduction <maximumf>, %116, %cst_47 [1] : vector<8x8xf32> to vector<8xf32>
    %118 = vector.shape_cast %117 : vector<8xf32> to vector<8x1xf32>
    %119 = vector.broadcast %118 : vector<8x1xf32> to vector<8x8xf32>
    %120 = arith.subf %116, %119 : vector<8x8xf32>
    %121 = math.exp %120 : vector<8x8xf32>
    %cst_48 = arith.constant dense<0.000000e+00> : vector<8xf32>
    %122 = vector.multi_reduction <add>, %121, %cst_48 [1] : vector<8x8xf32> to vector<8xf32>
    %123 = vector.shape_cast %122 : vector<8xf32> to vector<8x1xf32>
    %124 = tpu.reciprocal %123 {approx = true} : vector<8x1xf32> -> vector<8x1xf32>
    %125 = vector.broadcast %124 : vector<8x1xf32> to vector<8x8xf32>
    %126 = arith.mulf %121, %125 : vector<8x8xf32>
    %127 = arith.truncf %126 : vector<8x8xf32> to vector<8x8xbf16>
    %cst_49 = arith.constant dense<0.000000e+00> : vector<8x8xf32>
    %128 = tpu.matmul %127, %115, %cst_49 {dimension_numbers = #tpu.dot_dimension_numbers<[1], [0], [0], [1], [0, 0, 1, 1], [], []>} : vector<8x8xbf16>, vector<8x8xbf16>, vector<8x8xf32> -> vector<8x8xf32>
    %c1_50 = arith.constant 1 : index
    %c0_51 = arith.constant 0 : index
    %c8_52 = arith.constant 8 : index
    %129 = vector.load %arg5[%c1_50, %c0_51, %c8_52] : memref<2x8x32xf32, #tpu.memory_space<vmem>>, vector<1x8x8xf32>
    %130 = vector.shape_cast %129 : vector<1x8x8xf32> to vector<8x8xf32>
    %131 = vector.shape_cast %128 : vector<8x8xf32> to vector<1x8x8xf32>
    tpu.vector_store %arg5[%c1_50, %c0_51, %c8_52], %131 {strides = array<i32>} : memref<2x8x32xf32, #tpu.memory_space<vmem>>, vector<1x8x8xf32>,
    %132 = vector.extract_strided_slice %93 {offsets = [0, 16], sizes = [8, 8], strides = [1, 1]} : vector<8x32xbf16> to vector<8x8xbf16>
    %133 = vector.extract_strided_slice %95 {offsets = [0, 16], sizes = [8, 8], strides = [1, 1]} : vector<8x32xbf16> to vector<8x8xbf16>
    %cst_53 = arith.constant dense<0.000000e+00> : vector<8x8xf32>
    %134 = tpu.matmul %132, %133, %cst_53 {dimension_numbers = #tpu.dot_dimension_numbers<[1], [1], [0], [0], [0, 0, 1, 0], [], []>} : vector<8x8xbf16>, vector<8x8xbf16>, vector<8x8xf32> -> vector<8x8xf32>
    %cst_54 = arith.constant dense<0xFF800000> : vector<8xf32>
    %135 = vector.multi_reduction <maximumf>, %134, %cst_54 [1] : vector<8x8xf32> to vector<8xf32>
    %136 = vector.shape_cast %135 : vector<8xf32> to vector<8x1xf32>
    %137 = vector.broadcast %136 : vector<8x1xf32> to vector<8x8xf32>
    %138 = arith.subf %134, %137 : vector<8x8xf32>
    %139 = math.exp %138 : vector<8x8xf32>
    %cst_55 = arith.constant dense<0.000000e+00> : vector<8xf32>
    %140 = vector.multi_reduction <add>, %139, %cst_55 [1] : vector<8x8xf32> to vector<8xf32>
    %141 = vector.shape_cast %140 : vector<8xf32> to vector<8x1xf32>
    %142 = tpu.reciprocal %141 {approx = true} : vector<8x1xf32> -> vector<8x1xf32>
    %143 = vector.broadcast %142 : vector<8x1xf32> to vector<8x8xf32>
    %144 = arith.mulf %139, %143 : vector<8x8xf32>
    %145 = arith.truncf %144 : vector<8x8xf32> to vector<8x8xbf16>
    %cst_56 = arith.constant dense<0.000000e+00> : vector<8x8xf32>
    %146 = tpu.matmul %145, %133, %cst_56 {dimension_numbers = #tpu.dot_dimension_numbers<[1], [0], [0], [1], [0, 0, 1, 1], [], []>} : vector<8x8xbf16>, vector<8x8xbf16>, vector<8x8xf32> -> vector<8x8xf32>
    %c1_57 = arith.constant 1 : index
    %c0_58 = arith.constant 0 : index
    %c16_59 = arith.constant 16 : index
    %147 = vector.load %arg5[%c1_57, %c0_58, %c16_59] : memref<2x8x32xf32, #tpu.memory_space<vmem>>, vector<1x8x8xf32>
    %148 = vector.shape_cast %147 : vector<1x8x8xf32> to vector<8x8xf32>
    %149 = vector.shape_cast %146 : vector<8x8xf32> to vector<1x8x8xf32>
    tpu.vector_store %arg5[%c1_57, %c0_58, %c16_59], %149 {strides = array<i32>} : memref<2x8x32xf32, #tpu.memory_space<vmem>>, vector<1x8x8xf32>,
    %150 = vector.extract_strided_slice %93 {offsets = [0, 24], sizes = [8, 8], strides = [1, 1]} : vector<8x32xbf16> to vector<8x8xbf16>
    %151 = vector.extract_strided_slice %95 {offsets = [0, 24], sizes = [8, 8], strides = [1, 1]} : vector<8x32xbf16> to vector<8x8xbf16>
    %cst_60 = arith.constant dense<0.000000e+00> : vector<8x8xf32>
    %152 = tpu.matmul %150, %151, %cst_60 {dimension_numbers = #tpu.dot_dimension_numbers<[1], [1], [0], [0], [0, 0, 1, 0], [], []>} : vector<8x8xbf16>, vector<8x8xbf16>, vector<8x8xf32> -> vector<8x8xf32>
    %cst_61 = arith.constant dense<0xFF800000> : vector<8xf32>
    %153 = vector.multi_reduction <maximumf>, %152, %cst_61 [1] : vector<8x8xf32> to vector<8xf32>
    %154 = vector.shape_cast %153 : vector<8xf32> to vector<8x1xf32>
    %155 = vector.broadcast %154 : vector<8x1xf32> to vector<8x8xf32>
    %156 = arith.subf %152, %155 : vector<8x8xf32>
    %157 = math.exp %156 : vector<8x8xf32>
    %cst_62 = arith.constant dense<0.000000e+00> : vector<8xf32>
    %158 = vector.multi_reduction <add>, %157, %cst_62 [1] : vector<8x8xf32> to vector<8xf32>
    %159 = vector.shape_cast %158 : vector<8xf32> to vector<8x1xf32>
    %160 = tpu.reciprocal %159 {approx = true} : vector<8x1xf32> -> vector<8x1xf32>
    %161 = vector.broadcast %160 : vector<8x1xf32> to vector<8x8xf32>
    %162 = arith.mulf %157, %161 : vector<8x8xf32>
    %163 = arith.truncf %162 : vector<8x8xf32> to vector<8x8xbf16>
    %cst_63 = arith.constant dense<0.000000e+00> : vector<8x8xf32>
    %164 = tpu.matmul %163, %151, %cst_63 {dimension_numbers = #tpu.dot_dimension_numbers<[1], [0], [0], [1], [0, 0, 1, 1], [], []>} : vector<8x8xbf16>, vector<8x8xbf16>, vector<8x8xf32> -> vector<8x8xf32>
    %c1_64 = arith.constant 1 : index
    %c0_65 = arith.constant 0 : index
    %c24_66 = arith.constant 24 : index
    %165 = vector.load %arg5[%c1_64, %c0_65, %c24_66] : memref<2x8x32xf32, #tpu.memory_space<vmem>>, vector<1x8x8xf32>
    %166 = vector.shape_cast %165 : vector<1x8x8xf32> to vector<8x8xf32>
    %167 = vector.shape_cast %164 : vector<8x8xf32> to vector<1x8x8xf32>
    tpu.vector_store %arg5[%c1_64, %c0_65, %c24_66], %167 {strides = array<i32>} : memref<2x8x32xf32, #tpu.memory_space<vmem>>, vector<1x8x8xf32>,
    return
  }
  func.func @transform_0(%arg0: i32, %arg1: i32) -> (i32, i32, i32) {
    %c0_i32 = arith.constant 0 : i32
    %c0_i32_0 = arith.constant 0 : i32
    %c0_i32_1 = arith.constant 0 : i32
    return %arg0, %c0_i32, %c0_i32_0 : i32, i32, i32
  }
  func.func @transform_1(%arg0: i32, %arg1: i32) -> (i32, i32) {
    %c0_i32 = arith.constant 0 : i32
    %c0_i32_0 = arith.constant 0 : i32
    %c0_i32_1 = arith.constant 0 : i32
    return %c0_i32, %c0_i32_0 : i32, i32
  }
  func.func @transform_2(%arg0: i32, %arg1: i32) -> (i32, i32) {
    %c0_i32 = arith.constant 0 : i32
    %c0_i32_0 = arith.constant 0 : i32
    %c0_i32_1 = arith.constant 0 : i32
    return %c0_i32, %c0_i32_0 : i32, i32
  }
  func.func @transform_3(%arg0: i32, %arg1: i32) -> (i32, i32, i32) {
    %c0_i32 = arith.constant 0 : i32
    %c0_i32_0 = arith.constant 0 : i32
    return %arg0, %arg1, %c0_i32 : i32, i32, i32
  }
}

</mosaic_0001>

<llo_original>
// kernel: tpu_custom_call.1
$region0: #{tpu_custom_call.1}
  #allocation0 [shape = 'u32[]', space=smem, size = 0x4, offset = 0x4, fixed_abs, tag = 'smem constant byte address 0x4 - core index']
  #allocation1 [shape = 'u32[144,128]{1,0:T(1,128)}', space=vmem, size = 0x12000, scoped, tag = 'internal scratch']
  #allocation2 [shape = 'bf16[2,8,32]{2,1,0:T(8,128)(2,1)}', space=vmem, size = 0x1000, scoped, tag = 'scratch operand']
  %s0 = inlined_call_operand.hbm [shape: bf16[2,8,32], index: 0, kind: input, shape index: {}]
  %s1 = inlined_call_operand.hbm [shape: bf16[32,32], index: 1, kind: input, shape index: {}]
  %s2 = inlined_call_operand.hbm [shape: bf16[32,32], index: 2, kind: input, shape index: {}]
  %s3 = inlined_call_operand.hbm [shape: f32[2,8,32], index: 3, kind: output, shape index: {}]
  %s4 = sld [smem:[#allocation0]]
  $region38: #{tpu_custom_call.1} parent=0
    _
  %s6 = ssub.s32 1, %s4
  %s7 = scalar_select 0, %s6, %s4
  $region1: #{tpu_custom_call.1} parent=0
    #allocation3 [shape = 'u8[4096]{0}', space=vmem, size = 0x1000, scoped, tag = 'input window, operand 0, single buffered']
    #allocation4 [shape = 's32[1]{0}', space=sflag, size = 0x4, scoped, tag = 'scoped memory for tpu_custom_call.1']
    #allocation5 [shape = 's32[1]{0}', space=sflag, size = 0x4, scoped, tag = 'scoped memory for tpu_custom_call.1']
    #allocation6 [shape = 'u8[8192]{0}', space=vmem, size = 0x2000, scoped, tag = 'input window, operand 1, single buffered']
    #allocation7 [shape = 's32[1]{0}', space=sflag, size = 0x4, scoped, tag = 'scoped memory for tpu_custom_call.1']
    #allocation8 [shape = 'u8[8192]{0}', space=vmem, size = 0x2000, scoped, tag = 'input window, operand 2, single buffered']
    #allocation9 [shape = 'u8[8192]{0}', space=vmem, size = 0x2000, scoped, tag = 'output window, operand 0, single buffered']
    %8 = vsyncpa [#allocation4], 0
    %9 = vsyncpa [#allocation7], 0
    %10 = vsyncpa [#allocation5], 0
    // Predicated region
    $region2: #{tpu_custom_call.1} parent=1 // pred_check
      _
    $region3: #{tpu_custom_call.1} parent=1 // pred_check_branch
      %12 = sbr.rel (0) target = $region5
    $region4: #{tpu_custom_call.1} parent=1 // pred_region
      %s14 = ssub.s32 128, 128
      %15 = vsyncadd [#allocation4], %s14
      %s16 = sshll.u32 [#allocation3], 4
      %s17 = int_to_ptr.vmem [resolvable:$true] %s16
      %22 = dma.hbm_to_vmem [thread:$0]  %s0, 128, %s17, [#allocation4], 64, 64, 4
    $region5: #{tpu_custom_call.1} parent=1 // pred_fallthru
      _
    // Predicated region
    $region6: #{tpu_custom_call.1} parent=1 // pred_check
      _
    $region7: #{tpu_custom_call.1} parent=1 // pred_check_branch
      %24 = sbr.rel (0) target = $region9
    $region8: #{tpu_custom_call.1} parent=1 // pred_region
      %s26 = ssub.s32 256, 256
      %27 = vsyncadd [#allocation7], %s26
      %s28 = sshll.u32 [#allocation6], 4
      %s29 = int_to_ptr.vmem [resolvable:$true] %s28
      %34 = dma.hbm_to_vmem [thread:$0]  %s1, 256, %s29, [#allocation7], 64, 64, 4
    $region9: #{tpu_custom_call.1} parent=1 // pred_fallthru
      _
    // Predicated region
    $region10: #{tpu_custom_call.1} parent=1 // pred_check
      _
    $region11: #{tpu_custom_call.1} parent=1 // pred_check_branch
      %36 = sbr.rel (0) target = $region13
    $region12: #{tpu_custom_call.1} parent=1 // pred_region
      %s38 = ssub.s32 256, 256
      %39 = vsyncadd [#allocation7], %s38
      %s40 = sshll.u32 [#allocation8], 4
      %s41 = int_to_ptr.vmem [resolvable:$true] %s40
      %46 = dma.hbm_to_vmem [thread:$0]  %s2, 256, %s41, [#allocation7], 64, 64, 4
    $region13: #{tpu_custom_call.1} parent=1 // pred_fallthru
      _
    // Predicated region
    $region14: #{tpu_custom_call.1} parent=1 // pred_check
      _
    $region15: #{tpu_custom_call.1} parent=1 // pred_check_branch
      %48 = sbr.rel (0) target = $region17
    $region16: #{tpu_custom_call.1} parent=1 // pred_region
      %49 = dma.done [#allocation4], 128
    $region17: #{tpu_custom_call.1} parent=1 // pred_fallthru
      _
    // Predicated region
    $region18: #{tpu_custom_call.1} parent=1 // pred_check
      _
    $region19: #{tpu_custom_call.1} parent=1 // pred_check_branch
      %51 = sbr.rel (0) target = $region21
    $region20: #{tpu_custom_call.1} parent=1 // pred_region
      %52 = dma.done [#allocation7], 256
    $region21: #{tpu_custom_call.1} parent=1 // pred_fallthru
      _
    // Predicated region
    $region22: #{tpu_custom_call.1} parent=1 // pred_check
      _
    $region23: #{tpu_custom_call.1} parent=1 // pred_check_branch
      %54 = sbr.rel (0) target = $region25
    $region24: #{tpu_custom_call.1} parent=1 // pred_region
      %55 = dma.done [#allocation7], 256
    $region25: #{tpu_custom_call.1} parent=1 // pred_fallthru
      _
    %p57 = scmp.eq.s32.totalorder 0, 0
    // Predicated region
    $region26: #{tpu_custom_call.1} parent=1 // pred_check
      %p58 = pneg %p57
    $region27: #{tpu_custom_call.1} parent=1 // pred_check_branch
      %60 = sbr.rel (%p58) target = $region29
    $region28: #{tpu_custom_call.1} parent=1 // pred_region
      %v61 = vld [vmem:[#allocation8] sm:$0xf]
      %v62 = vld [vmem:[#allocation8 + $0x4] sm:$0xf]
      %v63 = vld [vmem:[#allocation8 + $0x8] sm:$0xf]
      %v64 = vld [vmem:[#allocation8 + $0xc] sm:$0xf]
      %v65 = vld [vmem:[#allocation3] sm:$0xf]
      %v70 = vunpack.c.l.b16 %v61
      %v71 = vunpack.c.l.b16 %v62
      %v72 = vunpack.c.l.b16 %v63
      %v73 = vunpack.c.l.b16 %v64
      %v74 = vpack.c.b16 %v71, %v70
      %v75 = vpack.c.b16 %v73, %v72
      %vm76 = vcmask 261120
      %v78 = vsel %vm76, %v65, 0
      %v81 = vsel %vm76, %v74, 0
      %v84 = vsel %vm76, %v75, 0
      %86 = vmatprep.subr.bf16.mxu0 0
      %87 = vmatpush1.bf16.xpose.msra.mxu0 %v81
      %88 = vmatprep.subr.bf16.mxu0 0
      %89 = vmatpush1.bf16.xpose.msra.mxu0 %v84
      %90 = vmatprep.subr.bf16.mxu0 0
      %91 = vmatpush1.bf16.xpose.msra.mxu0 0
      %92 = vmatprep.subr.bf16.mxu0 0
      %93 = vmatpush1.bf16.xpose.msra.mxu0 0
      %94 = vmatprep.subr.bf16.mxu0 0
      %95 = vmatpush1.bf16.xpose.msra.mxu0 0
      %96 = vmatprep.subr.bf16.mxu0 0
      %97 = vmatpush1.bf16.xpose.msra.mxu0 0
      %98 = vmatprep.subr.bf16.mxu0 0
      %99 = vmatpush1.bf16.xpose.msra.mxu0 0
      %100 = vmatprep.subr.bf16.mxu0 0
      %101 = vmatpush1.bf16.xpose.msra.mxu0 0
      %102 = vmatprep.subr.bf16.mxu0 0
      %103 = vmatpush1.bf16.xpose.msra.mxu0 0
      %104 = vmatprep.subr.bf16.mxu0 0
      %105 = vmatpush1.bf16.xpose.msra.mxu0 0
      %106 = vmatprep.subr.bf16.mxu0 0
      %107 = vmatpush1.bf16.xpose.msra.mxu0 0
      %108 = vmatprep.subr.bf16.mxu0 0
      %109 = vmatpush1.bf16.xpose.msra.mxu0 0
      %110 = vmatprep.subr.bf16.mxu0 0
      %111 = vmatpush1.bf16.xpose.msra.mxu0 0
      %112 = vmatprep.subr.bf16.mxu0 0
      %113 = vmatpush1.bf16.xpose.msra.mxu0 0
      %114 = vmatprep.subr.bf16.mxu0 0
      %115 = vmatpush1.bf16.xpose.msra.mxu0 0
      %116 = vmatprep.subr.bf16.mxu0 0
      %117 = vmatpush1.bf16.xpose.msra.mxu0 0
      %118 = vmatprep.mubr.bf16.mxu0 0
      %119 = vmatmul.mubr.bf16.gmra.mrb[0].mxu0 %v78
      %v120 = vpop.f32.mrb[0].mxu0
      %v121 = vadd.f32 0.0, %v120
      %v122 = vpop.f32.mrb[0].mxu0
      %v123 = vpop.f32.mrb[0].mxu0
      %v124 = vpop.f32.mrb[0].mxu0
      %125 = vdwg.mxu0
      %v126 = vpack.c.bf16 %v121, %v121
      %vm127 = vcmask 257024
      %128 = vst.msk [vmem:[#allocation2] sm:$0xf] %vm127, %v126
      %s129 = scalar_lea.vmem [#allocation3], 4
      %v130 = vld [vmem:[%s129] sm:$0xf]
      %v132 = vsel %vm76, %v130, 0
      %134 = vmatprep.subr.bf16.mxu0 0
      %135 = vmatpush1.bf16.xpose.msra.mxu0 %v81
      %136 = vmatprep.subr.bf16.mxu0 0
      %137 = vmatpush1.bf16.xpose.msra.mxu0 %v84
      %138 = vmatprep.subr.bf16.mxu0 0
      %139 = vmatpush1.bf16.xpose.msra.mxu0 0
      %140 = vmatprep.subr.bf16.mxu0 0
      %141 = vmatpush1.bf16.xpose.msra.mxu0 0
      %142 = vmatprep.subr.bf16.mxu0 0
      %143 = vmatpush1.bf16.xpose.msra.mxu0 0
      %144 = vmatprep.subr.bf16.mxu0 0
      %145 = vmatpush1.bf16.xpose.msra.mxu0 0
      %146 = vmatprep.subr.bf16.mxu0 0
      %147 = vmatpush1.bf16.xpose.msra.mxu0 0
      %148 = vmatprep.subr.bf16.mxu0 0
      %149 = vmatpush1.bf16.xpose.msra.mxu0 0
      %150 = vmatprep.subr.bf16.mxu0 0
      %151 = vmatpush1.bf16.xpose.msra.mxu0 0
      %152 = vmatprep.subr.bf16.mxu0 0
      %153 = vmatpush1.bf16.xpose.msra.mxu0 0
      %154 = vmatprep.subr.bf16.mxu0 0
      %155 = vmatpush1.bf16.xpose.msra.mxu0 0
      %156 = vmatprep.subr.bf16.mxu0 0
      %157 = vmatpush1.bf16.xpose.msra.mxu0 0
      %158 = vmatprep.subr.bf16.mxu0 0
      %159 = vmatpush1.bf16.xpose.msra.mxu0 0
      %160 = vmatprep.subr.bf16.mxu0 0
      %161 = vmatpush1.bf16.xpose.msra.mxu0 0
      %162 = vmatprep.subr.bf16.mxu0 0
      %163 = vmatpush1.bf16.xpose.msra.mxu0 0
      %164 = vmatprep.subr.bf16.mxu0 0
      %165 = vmatpush1.bf16.xpose.msra.mxu0 0
      %166 = vmatprep.mubr.bf16.mxu0 0
      %167 = vmatmul.mubr.bf16.gmra.mrb[0].mxu0 %v132
      %v168 = vpop.f32.mrb[0].mxu0
      %v169 = vadd.f32 0.0, %v168
      %v170 = vpop.f32.mrb[0].mxu0
      %v171 = vpop.f32.mrb[0].mxu0
      %v172 = vpop.f32.mrb[0].mxu0
      %173 = vdwg.mxu0
      %v174 = vpack.c.bf16 %v169, %v169
      %s175 = scalar_lea.vmem [#allocation2], 4
      %176 = vst.msk [vmem:[%s175] sm:$0xf] %vm127, %v174
    $region29: #{tpu_custom_call.1} parent=1 // pred_fallthru
      _
    %s177 = smul.u32 0, 8
    %v178 = vld [vmem:[#allocation6] sm:$0xf]
    %v179 = vld [vmem:[#allocation6 + $0x4] sm:$0xf]
    %v180 = vld [vmem:[#allocation6 + $0x8] sm:$0xf]
    %v181 = vld [vmem:[#allocation6 + $0xc] sm:$0xf]
    %s182 = sshra.s32 %s177, 3
    %s183 = sand.u32 %s177, 7
    %s184 = smul.addr %s182, 4
    %s185 = scalar_lea.vmem [#allocation3], %s184
    %v186 = vld [vmem:[%s185] sm:$0xf]
    %v191 = vunpack.c.l.b16 %v178
    %v192 = vunpack.c.l.b16 %v179
    %v193 = vunpack.c.l.b16 %v180
    %v194 = vunpack.c.l.b16 %v181
    %v195 = vpack.c.b16 %v192, %v191
    %v196 = vpack.c.b16 %v194, %v193
    %vm197 = vcmask 261120
    %v199 = vsel %vm197, %v186, 0
    %v202 = vsel %vm197, %v195, 0
    %v205 = vsel %vm197, %v196, 0
    %207 = vmatprep.subr.bf16.mxu0 0
    %208 = vmatpush1.bf16.xpose.msra.mxu0 %v202
    %209 = vmatprep.subr.bf16.mxu0 0
    %210 = vmatpush1.bf16.xpose.msra.mxu0 %v205
    %211 = vmatprep.subr.bf16.mxu0 0
    %212 = vmatpush1.bf16.xpose.msra.mxu0 0
    %213 = vmatprep.subr.bf16.mxu0 0
    %214 = vmatpush1.bf16.xpose.msra.mxu0 0
    %215 = vmatprep.subr.bf16.mxu0 0
    %216 = vmatpush1.bf16.xpose.msra.mxu0 0
    %217 = vmatprep.subr.bf16.mxu0 0
    %218 = vmatpush1.bf16.xpose.msra.mxu0 0
    %219 = vmatprep.subr.bf16.mxu0 0
    %220 = vmatpush1.bf16.xpose.msra.mxu0 0
    %221 = vmatprep.subr.bf16.mxu0 0
    %222 = vmatpush1.bf16.xpose.msra.mxu0 0
    %223 = vmatprep.subr.bf16.mxu0 0
    %224 = vmatpush1.bf16.xpose.msra.mxu0 0
    %225 = vmatprep.subr.bf16.mxu0 0
    %226 = vmatpush1.bf16.xpose.msra.mxu0 0
    %227 = vmatprep.subr.bf16.mxu0 0
    %228 = vmatpush1.bf16.xpose.msra.mxu0 0
    %229 = vmatprep.subr.bf16.mxu0 0
    %230 = vmatpush1.bf16.xpose.msra.mxu0 0
    %231 = vmatprep.subr.bf16.mxu0 0
    %232 = vmatpush1.bf16.xpose.msra.mxu0 0
    %233 = vmatprep.subr.bf16.mxu0 0
    %234 = vmatpush1.bf16.xpose.msra.mxu0 0
    %235 = vmatprep.subr.bf16.mxu0 0
    %236 = vmatpush1.bf16.xpose.msra.mxu0 0
    %237 = vmatprep.subr.bf16.mxu0 0
    %238 = vmatpush1.bf16.xpose.msra.mxu0 0
    %239 = vmatprep.mubr.bf16.mxu0 0
    %240 = vmatmul.mubr.bf16.gmra.mrb[0].mxu0 %v199
    %v241 = vpop.f32.mrb[0].mxu0
    %v242 = vadd.f32 0.0, %v241
    %v243 = vpop.f32.mrb[0].mxu0
    %v244 = vpop.f32.mrb[0].mxu0
    %v245 = vpop.f32.mrb[0].mxu0
    %246 = vdwg.mxu0
    %v247 = vmul.f32 %v242, 0.17677669
    %v248 = vpack.c.bf16 %v247, %v247
    %v249 = vld [vmem:[#allocation2] sm:$0xf]
    %vm250 = vcmask 64512
    %v252 = vsel %vm250, %v248, 0
    %v255 = vsel %vm250, %v249, 0
    %257 = vmatprep.subr.bf16.mxu0 0
    %258 = vmatpush1.bf16.xpose.msra.mxu0 %v255
    %259 = vmatprep.subr.bf16.mxu0 0
    %260 = vmatpush1.bf16.xpose.msra.mxu0 0
    %261 = vmatprep.subr.bf16.mxu0 0
    %262 = vmatpush1.bf16.xpose.msra.mxu0 0
    %263 = vmatprep.subr.bf16.mxu0 0
    %264 = vmatpush1.bf16.xpose.msra.mxu0 0
    %265 = vmatprep.subr.bf16.mxu0 0
    %266 = vmatpush1.bf16.xpose.msra.mxu0 0
    %267 = vmatprep.subr.bf16.mxu0 0
    %268 = vmatpush1.bf16.xpose.msra.mxu0 0
    %269 = vmatprep.subr.bf16.mxu0 0
    %270 = vmatpush1.bf16.xpose.msra.mxu0 0
    %271 = vmatprep.subr.bf16.mxu0 0
    %272 = vmatpush1.bf16.xpose.msra.mxu0 0
    %273 = vmatprep.subr.bf16.mxu0 0
    %274 = vmatpush1.bf16.xpose.msra.mxu0 0
    %275 = vmatprep.subr.bf16.mxu0 0
    %276 = vmatpush1.bf16.xpose.msra.mxu0 0
    %277 = vmatprep.subr.bf16.mxu0 0
    %278 = vmatpush1.bf16.xpose.msra.mxu0 0
    %279 = vmatprep.subr.bf16.mxu0 0
    %280 = vmatpush1.bf16.xpose.msra.mxu0 0
    %281 = vmatprep.subr.bf16.mxu0 0
    %282 = vmatpush1.bf16.xpose.msra.mxu0 0
    %283 = vmatprep.subr.bf16.mxu0 0
    %284 = vmatpush1.bf16.xpose.msra.mxu0 0
    %285 = vmatprep.subr.bf16.mxu0 0
    %286 = vmatpush1.bf16.xpose.msra.mxu0 0
    %287 = vmatprep.subr.bf16.mxu0 0
    %288 = vmatpush1.bf16.xpose.msra.mxu0 0
    %289 = vmatprep.mubr.bf16.mxu0 0
    %290 = vmatmul.mubr.bf16.gmra.mrb[0].mxu0 %v252
    %v291 = vpop.f32.mrb[0].mxu0
    %v292 = vadd.f32 0.0, %v291
    %v293 = vpop.f32.mrb[0].mxu0
    %v294 = vpop.f32.mrb[0].mxu0
    %v295 = vpop.f32.mrb[0].mxu0
    %296 = vdwg.mxu0
    %v297 = vsel %vm250, %v292, -inf
    %298 = vmax.xlane.f32.xlu0 %v297
    %v299 = vpop.xlane.xlu0 %298
    %v300 = vsub.f32 %v292, %v299
    %v301 = vmul.f32 %v300, 1.442695
    %v302 = vpow.pop %v301
    %v303 = vsel %vm250, %v302, 0.0
    %304 = vadd.xlane.f32.xlu0 %v303
    %v305 = vpop.xlane.xlu0 %304
    %v306 = vrcp.pop %v305
    %v307 = vmul.f32 %v302, %v306
    %v308 = vpack.c.bf16 %v307, %v307
    %v310 = vsel %vm250, %v308, 0
    %vm312 = vcmask 1043456
    %v313 = vsel %vm312, %v249, 0
    %315 = vmatprep.subr.bf16.mxu0 0
    %316 = vmatpush1.bf16.msra.mxu0 %v313
    %317 = vmatprep.subr.bf16.mxu0 0
    %318 = vmatpush1.bf16.msra.mxu0 0
    %319 = vmatprep.subr.bf16.mxu0 0
    %320 = vmatpush1.bf16.msra.mxu0 0
    %321 = vmatprep.subr.bf16.mxu0 0
    %322 = vmatpush1.bf16.msra.mxu0 0
    %323 = vmatprep.subr.bf16.mxu0 0
    %324 = vmatpush1.bf16.msra.mxu0 0
    %325 = vmatprep.subr.bf16.mxu0 0
    %326 = vmatpush1.bf16.msra.mxu0 0
    %327 = vmatprep.subr.bf16.mxu0 0
    %328 = vmatpush1.bf16.msra.mxu0 0
    %329 = vmatprep.subr.bf16.mxu0 0
    %330 = vmatpush1.bf16.msra.mxu0 0
    %331 = vmatprep.subr.bf16.mxu0 0
    %332 = vmatpush1.bf16.msra.mxu0 0
    %333 = vmatprep.subr.bf16.mxu0 0
    %334 = vmatpush1.bf16.msra.mxu0 0
    %335 = vmatprep.subr.bf16.mxu0 0
    %336 = vmatpush1.bf16.msra.mxu0 0
    %337 = vmatprep.subr.bf16.mxu0 0
    %338 = vmatpush1.bf16.msra.mxu0 0
    %339 = vmatprep.subr.bf16.mxu0 0
    %340 = vmatpush1.bf16.msra.mxu0 0
    %341 = vmatprep.subr.bf16.mxu0 0
    %342 = vmatpush1.bf16.msra.mxu0 0
    %343 = vmatprep.subr.bf16.mxu0 0
    %344 = vmatpush1.bf16.msra.mxu0 0
    %345 = vmatprep.subr.bf16.mxu0 0
    %346 = vmatpush1.bf16.msra.mxu0 0
    %347 = vmatprep.mubr.bf16.mxu0 0
    %348 = vmatmul.mubr.bf16.gmra.mrb[0].mxu0 %v310
    %v349 = vpop.f32.mrb[0].mxu0
    %v350 = vadd.f32 0.0, %v349
    %v351 = vpop.f32.mrb[0].mxu0
    %v352 = vpop.f32.mrb[0].mxu0
    %v353 = vpop.f32.mrb[0].mxu0
    %354 = vdwg.mxu0
    %355 = vst.msk [vmem:[#allocation9] sm:$0xff] %vm250, %v350
    %357 = vrot.lane.b32.xlu0 %v248, 120
    %v358 = vpop.permute.xlu0 %357
    %v360 = vunpack.c.l.b16 %v249
    %v361 = vpack.c.b16 %v360, %v360
    %362 = vrot.lane.b32.xlu0 %v361, 120
    %v363 = vpop.permute.xlu0 %362
    %v365 = vsel %vm250, %v358, 0
    %v368 = vsel %vm250, %v363, 0
    %370 = vmatprep.subr.bf16.mxu0 0
    %371 = vmatpush1.bf16.xpose.msra.mxu0 %v368
    %372 = vmatprep.subr.bf16.mxu0 0
    %373 = vmatpush1.bf16.xpose.msra.mxu0 0
    %374 = vmatprep.subr.bf16.mxu0 0
    %375 = vmatpush1.bf16.xpose.msra.mxu0 0
    %376 = vmatprep.subr.bf16.mxu0 0
    %377 = vmatpush1.bf16.xpose.msra.mxu0 0
    %378 = vmatprep.subr.bf16.mxu0 0
    %379 = vmatpush1.bf16.xpose.msra.mxu0 0
    %380 = vmatprep.subr.bf16.mxu0 0
    %381 = vmatpush1.bf16.xpose.msra.mxu0 0
    %382 = vmatprep.subr.bf16.mxu0 0
    %383 = vmatpush1.bf16.xpose.msra.mxu0 0
    %384 = vmatprep.subr.bf16.mxu0 0
    %385 = vmatpush1.bf16.xpose.msra.mxu0 0
    %386 = vmatprep.subr.bf16.mxu0 0
    %387 = vmatpush1.bf16.xpose.msra.mxu0 0
    %388 = vmatprep.subr.bf16.mxu0 0
    %389 = vmatpush1.bf16.xpose.msra.mxu0 0
    %390 = vmatprep.subr.bf16.mxu0 0
    %391 = vmatpush1.bf16.xpose.msra.mxu0 0
    %392 = vmatprep.subr.bf16.mxu0 0
    %393 = vmatpush1.bf16.xpose.msra.mxu0 0
    %394 = vmatprep.subr.bf16.mxu0 0
    %395 = vmatpush1.bf16.xpose.msra.mxu0 0
    %396 = vmatprep.subr.bf16.mxu0 0
    %397 = vmatpush1.bf16.xpose.msra.mxu0 0
    %398 = vmatprep.subr.bf16.mxu0 0
    %399 = vmatpush1.bf16.xpose.msra.mxu0 0
    %400 = vmatprep.subr.bf16.mxu0 0
    %401 = vmatpush1.bf16.xpose.msra.mxu0 0
    %402 = vmatprep.mubr.bf16.mxu0 0
    %403 = vmatmul.mubr.bf16.gmra.mrb[0].mxu0 %v365
    %v404 = vpop.f32.mrb[0].mxu0
    %v405 = vadd.f32 0.0, %v404
    %v406 = vpop.f32.mrb[0].mxu0
    %v407 = vpop.f32.mrb[0].mxu0
    %v408 = vpop.f32.mrb[0].mxu0
    %409 = vdwg.mxu0
    %v410 = vsel %vm250, %v405, -inf
    %411 = vmax.xlane.f32.xlu0 %v410
    %v412 = vpop.xlane.xlu0 %411
    %v413 = vsub.f32 %v405, %v412
    %v414 = vmul.f32 %v413, 1.442695
    %v415 = vpow.pop %v414
    %v416 = vsel %vm250, %v415, 0.0
    %417 = vadd.xlane.f32.xlu0 %v416
    %v418 = vpop.xlane.xlu0 %417
    %v419 = vrcp.pop %v418
    %v420 = vmul.f32 %v415, %v419
    %v421 = vpack.c.bf16 %v420, %v420
    %v423 = vsel %vm250, %v421, 0
    %v425 = vsel %vm312, %v363, 0
    %427 = vmatprep.subr.bf16.mxu0 0
    %428 = vmatpush1.bf16.msra.mxu0 %v425
    %429 = vmatprep.subr.bf16.mxu0 0
    %430 = vmatpush1.bf16.msra.mxu0 0
    %431 = vmatprep.subr.bf16.mxu0 0
    %432 = vmatpush1.bf16.msra.mxu0 0
    %433 = vmatprep.subr.bf16.mxu0 0
    %434 = vmatpush1.bf16.msra.mxu0 0
    %435 = vmatprep.subr.bf16.mxu0 0
    %436 = vmatpush1.bf16.msra.mxu0 0
    %437 = vmatprep.subr.bf16.mxu0 0
    %438 = vmatpush1.bf16.msra.mxu0 0
    %439 = vmatprep.subr.bf16.mxu0 0
    %440 = vmatpush1.bf16.msra.mxu0 0
    %441 = vmatprep.subr.bf16.mxu0 0
    %442 = vmatpush1.bf16.msra.mxu0 0
    %443 = vmatprep.subr.bf16.mxu0 0
    %444 = vmatpush1.bf16.msra.mxu0 0
    %445 = vmatprep.subr.bf16.mxu0 0
    %446 = vmatpush1.bf16.msra.mxu0 0
    %447 = vmatprep.subr.bf16.mxu0 0
    %448 = vmatpush1.bf16.msra.mxu0 0
    %449 = vmatprep.subr.bf16.mxu0 0
    %450 = vmatpush1.bf16.msra.mxu0 0
    %451 = vmatprep.subr.bf16.mxu0 0
    %452 = vmatpush1.bf16.msra.mxu0 0
    %453 = vmatprep.subr.bf16.mxu0 0
    %454 = vmatpush1.bf16.msra.mxu0 0
    %455 = vmatprep.subr.bf16.mxu0 0
    %456 = vmatpush1.bf16.msra.mxu0 0
    %457 = vmatprep.subr.bf16.mxu0 0
    %458 = vmatpush1.bf16.msra.mxu0 0
    %459 = vmatprep.mubr.bf16.mxu0 0
    %460 = vmatmul.mubr.bf16.gmra.mrb[0].mxu0 %v423
    %v461 = vpop.f32.mrb[0].mxu0
    %v462 = vadd.f32 0.0, %v461
    %v463 = vpop.f32.mrb[0].mxu0
    %v464 = vpop.f32.mrb[0].mxu0
    %v465 = vpop.f32.mrb[0].mxu0
    %466 = vdwg.mxu0
    %468 = vrot.lane.b32.xlu0 %v462, 8
    %v469 = vpop.permute.xlu0 %468
    %vm471 = vcmask 130112
    %472 = vst.msk [vmem:[#allocation9] sm:$0xff] %vm471, %v469
    %473 = vrot.lane.b32.xlu0 %v248, 112
    %v474 = vpop.permute.xlu0 %473
    %475 = vrot.lane.b32.xlu0 %v361, 112
    %v476 = vpop.permute.xlu0 %475
    %v478 = vsel %vm250, %v474, 0
    %v481 = vsel %vm250, %v476, 0
    %483 = vmatprep.subr.bf16.mxu0 0
    %484 = vmatpush1.bf16.xpose.msra.mxu0 %v481
    %485 = vmatprep.subr.bf16.mxu0 0
    %486 = vmatpush1.bf16.xpose.msra.mxu0 0
    %487 = vmatprep.subr.bf16.mxu0 0
    %488 = vmatpush1.bf16.xpose.msra.mxu0 0
    %489 = vmatprep.subr.bf16.mxu0 0
    %490 = vmatpush1.bf16.xpose.msra.mxu0 0
    %491 = vmatprep.subr.bf16.mxu0 0
    %492 = vmatpush1.bf16.xpose.msra.mxu0 0
    %493 = vmatprep.subr.bf16.mxu0 0
    %494 = vmatpush1.bf16.xpose.msra.mxu0 0
    %495 = vmatprep.subr.bf16.mxu0 0
    %496 = vmatpush1.bf16.xpose.msra.mxu0 0
    %497 = vmatprep.subr.bf16.mxu0 0
    %498 = vmatpush1.bf16.xpose.msra.mxu0 0
    %499 = vmatprep.subr.bf16.mxu0 0
    %500 = vmatpush1.bf16.xpose.msra.mxu0 0
    %501 = vmatprep.subr.bf16.mxu0 0
    %502 = vmatpush1.bf16.xpose.msra.mxu0 0
    %503 = vmatprep.subr.bf16.mxu0 0
    %504 = vmatpush1.bf16.xpose.msra.mxu0 0
    %505 = vmatprep.subr.bf16.mxu0 0
    %506 = vmatpush1.bf16.xpose.msra.mxu0 0
    %507 = vmatprep.subr.bf16.mxu0 0
    %508 = vmatpush1.bf16.xpose.msra.mxu0 0
    %509 = vmatprep.subr.bf16.mxu0 0
    %510 = vmatpush1.bf16.xpose.msra.mxu0 0
    %511 = vmatprep.subr.bf16.mxu0 0
    %512 = vmatpush1.bf16.xpose.msra.mxu0 0
    %513 = vmatprep.subr.bf16.mxu0 0
    %514 = vmatpush1.bf16.xpose.msra.mxu0 0
    %515 = vmatprep.mubr.bf16.mxu0 0
    %516 = vmatmul.mubr.bf16.gmra.mrb[0].mxu0 %v478
    %v517 = vpop.f32.mrb[0].mxu0
    %v518 = vadd.f32 0.0, %v517
    %v519 = vpop.f32.mrb[0].mxu0
    %v520 = vpop.f32.mrb[0].mxu0
    %v521 = vpop.f32.mrb[0].mxu0
    %522 = vdwg.mxu0
    %v523 = vsel %vm250, %v518, -inf
    %524 = vmax.xlane.f32.xlu0 %v523
    %v525 = vpop.xlane.xlu0 %524
    %v526 = vsub.f32 %v518, %v525
    %v527 = vmul.f32 %v526, 1.442695
    %v528 = vpow.pop %v527
    %v529 = vsel %vm250, %v528, 0.0
    %530 = vadd.xlane.f32.xlu0 %v529
    %v531 = vpop.xlane.xlu0 %530
    %v532 = vrcp.pop %v531
    %v533 = vmul.f32 %v528, %v532
    %v534 = vpack.c.bf16 %v533, %v533
    %v536 = vsel %vm250, %v534, 0
    %v538 = vsel %vm312, %v476, 0
    %540 = vmatprep.subr.bf16.mxu0 0
    %541 = vmatpush1.bf16.msra.mxu0 %v538
    %542 = vmatprep.subr.bf16.mxu0 0
    %543 = vmatpush1.bf16.msra.mxu0 0
    %544 = vmatprep.subr.bf16.mxu0 0
    %545 = vmatpush1.bf16.msra.mxu0 0
    %546 = vmatprep.subr.bf16.mxu0 0
    %547 = vmatpush1.bf16.msra.mxu0 0
    %548 = vmatprep.subr.bf16.mxu0 0
    %549 = vmatpush1.bf16.msra.mxu0 0
    %550 = vmatprep.subr.bf16.mxu0 0
    %551 = vmatpush1.bf16.msra.mxu0 0
    %552 = vmatprep.subr.bf16.mxu0 0
    %553 = vmatpush1.bf16.msra.mxu0 0
    %554 = vmatprep.subr.bf16.mxu0 0
    %555 = vmatpush1.bf16.msra.mxu0 0
    %556 = vmatprep.subr.bf16.mxu0 0
    %557 = vmatpush1.bf16.msra.mxu0 0
    %558 = vmatprep.subr.bf16.mxu0 0
    %559 = vmatpush1.bf16.msra.mxu0 0
    %560 = vmatprep.subr.bf16.mxu0 0
    %561 = vmatpush1.bf16.msra.mxu0 0
    %562 = vmatprep.subr.bf16.mxu0 0
    %563 = vmatpush1.bf16.msra.mxu0 0
    %564 = vmatprep.subr.bf16.mxu0 0
    %565 = vmatpush1.bf16.msra.mxu0 0
    %566 = vmatprep.subr.bf16.mxu0 0
    %567 = vmatpush1.bf16.msra.mxu0 0
    %568 = vmatprep.subr.bf16.mxu0 0
    %569 = vmatpush1.bf16.msra.mxu0 0
    %570 = vmatprep.subr.bf16.mxu0 0
    %571 = vmatpush1.bf16.msra.mxu0 0
    %572 = vmatprep.mubr.bf16.mxu0 0
    %573 = vmatmul.mubr.bf16.gmra.mrb[0].mxu0 %v536
    %v574 = vpop.f32.mrb[0].mxu0
    %v575 = vadd.f32 0.0, %v574
    %v576 = vpop.f32.mrb[0].mxu0
    %v577 = vpop.f32.mrb[0].mxu0
    %v578 = vpop.f32.mrb[0].mxu0
    %579 = vdwg.mxu0
    %581 = vrot.lane.b32.xlu0 %v575, 16
    %v582 = vpop.permute.xlu0 %581
    %vm584 = vcmask 195712
    %585 = vst.msk [vmem:[#allocation9] sm:$0xff] %vm584, %v582
    %586 = vrot.lane.b32.xlu0 %v248, 104
    %v587 = vpop.permute.xlu0 %586
    %588 = vrot.lane.b32.xlu0 %v361, 104
    %v589 = vpop.permute.xlu0 %588
    %v591 = vsel %vm250, %v587, 0
    %v594 = vsel %vm250, %v589, 0
    %596 = vmatprep.subr.bf16.mxu0 0
    %597 = vmatpush1.bf16.xpose.msra.mxu0 %v594
    %598 = vmatprep.subr.bf16.mxu0 0
    %599 = vmatpush1.bf16.xpose.msra.mxu0 0
    %600 = vmatprep.subr.bf16.mxu0 0
    %601 = vmatpush1.bf16.xpose.msra.mxu0 0
    %602 = vmatprep.subr.bf16.mxu0 0
    %603 = vmatpush1.bf16.xpose.msra.mxu0 0
    %604 = vmatprep.subr.bf16.mxu0 0
    %605 = vmatpush1.bf16.xpose.msra.mxu0 0
    %606 = vmatprep.subr.bf16.mxu0 0
    %607 = vmatpush1.bf16.xpose.msra.mxu0 0
    %608 = vmatprep.subr.bf16.mxu0 0
    %609 = vmatpush1.bf16.xpose.msra.mxu0 0
    %610 = vmatprep.subr.bf16.mxu0 0
    %611 = vmatpush1.bf16.xpose.msra.mxu0 0
    %612 = vmatprep.subr.bf16.mxu0 0
    %613 = vmatpush1.bf16.xpose.msra.mxu0 0
    %614 = vmatprep.subr.bf16.mxu0 0
    %615 = vmatpush1.bf16.xpose.msra.mxu0 0
    %616 = vmatprep.subr.bf16.mxu0 0
    %617 = vmatpush1.bf16.xpose.msra.mxu0 0
    %618 = vmatprep.subr.bf16.mxu0 0
    %619 = vmatpush1.bf16.xpose.msra.mxu0 0
    %620 = vmatprep.subr.bf16.mxu0 0
    %621 = vmatpush1.bf16.xpose.msra.mxu0 0
    %622 = vmatprep.subr.bf16.mxu0 0
    %623 = vmatpush1.bf16.xpose.msra.mxu0 0
    %624 = vmatprep.subr.bf16.mxu0 0
    %625 = vmatpush1.bf16.xpose.msra.mxu0 0
    %626 = vmatprep.subr.bf16.mxu0 0
    %627 = vmatpush1.bf16.xpose.msra.mxu0 0
    %628 = vmatprep.mubr.bf16.mxu0 0
    %629 = vmatmul.mubr.bf16.gmra.mrb[0].mxu0 %v591
    %v630 = vpop.f32.mrb[0].mxu0
    %v631 = vadd.f32 0.0, %v630
    %v632 = vpop.f32.mrb[0].mxu0
    %v633 = vpop.f32.mrb[0].mxu0
    %v634 = vpop.f32.mrb[0].mxu0
    %635 = vdwg.mxu0
    %v636 = vsel %vm250, %v631, -inf
    %637 = vmax.xlane.f32.xlu0 %v636
    %v638 = vpop.xlane.xlu0 %637
    %v639 = vsub.f32 %v631, %v638
    %v640 = vmul.f32 %v639, 1.442695
    %v641 = vpow.pop %v640
    %v642 = vsel %vm250, %v641, 0.0
    %643 = vadd.xlane.f32.xlu0 %v642
    %v644 = vpop.xlane.xlu0 %643
    %v645 = vrcp.pop %v644
    %v646 = vmul.f32 %v641, %v645
    %v647 = vpack.c.bf16 %v646, %v646
    %v649 = vsel %vm250, %v647, 0
    %v651 = vsel %vm312, %v589, 0
    %653 = vmatprep.subr.bf16.mxu0 0
    %654 = vmatpush1.bf16.msra.mxu0 %v651
    %655 = vmatprep.subr.bf16.mxu0 0
    %656 = vmatpush1.bf16.msra.mxu0 0
    %657 = vmatprep.subr.bf16.mxu0 0
    %658 = vmatpush1.bf16.msra.mxu0 0
    %659 = vmatprep.subr.bf16.mxu0 0
    %660 = vmatpush1.bf16.msra.mxu0 0
    %661 = vmatprep.subr.bf16.mxu0 0
    %662 = vmatpush1.bf16.msra.mxu0 0
    %663 = vmatprep.subr.bf16.mxu0 0
    %664 = vmatpush1.bf16.msra.mxu0 0
    %665 = vmatprep.subr.bf16.mxu0 0
    %666 = vmatpush1.bf16.msra.mxu0 0
    %667 = vmatprep.subr.bf16.mxu0 0
    %668 = vmatpush1.bf16.msra.mxu0 0
    %669 = vmatprep.subr.bf16.mxu0 0
    %670 = vmatpush1.bf16.msra.mxu0 0
    %671 = vmatprep.subr.bf16.mxu0 0
    %672 = vmatpush1.bf16.msra.mxu0 0
    %673 = vmatprep.subr.bf16.mxu0 0
    %674 = vmatpush1.bf16.msra.mxu0 0
    %675 = vmatprep.subr.bf16.mxu0 0
    %676 = vmatpush1.bf16.msra.mxu0 0
    %677 = vmatprep.subr.bf16.mxu0 0
    %678 = vmatpush1.bf16.msra.mxu0 0
    %679 = vmatprep.subr.bf16.mxu0 0
    %680 = vmatpush1.bf16.msra.mxu0 0
    %681 = vmatprep.subr.bf16.mxu0 0
    %682 = vmatpush1.bf16.msra.mxu0 0
    %683 = vmatprep.subr.bf16.mxu0 0
    %684 = vmatpush1.bf16.msra.mxu0 0
    %685 = vmatprep.mubr.bf16.mxu0 0
    %686 = vmatmul.mubr.bf16.gmra.mrb[0].mxu0 %v649
    %v687 = vpop.f32.mrb[0].mxu0
    %v688 = vadd.f32 0.0, %v687
    %v689 = vpop.f32.mrb[0].mxu0
    %v690 = vpop.f32.mrb[0].mxu0
    %v691 = vpop.f32.mrb[0].mxu0
    %692 = vdwg.mxu0
    %694 = vrot.lane.b32.xlu0 %v688, 24
    %v695 = vpop.permute.xlu0 %694
    %vm697 = vcmask 261312
    %698 = vst.msk [vmem:[#allocation9] sm:$0xff] %vm697, %v695
    %s699 = sadd.s32 %s182, 1
    %s700 = smul.addr %s699, 4
    %s701 = scalar_lea.vmem [#allocation3], %s700
    %v702 = vld [vmem:[%s701] sm:$0xf]
    %v704 = vsel %vm197, %v702, 0
    %706 = vmatprep.subr.bf16.mxu0 0
    %707 = vmatpush1.bf16.xpose.msra.mxu0 %v202
    %708 = vmatprep.subr.bf16.mxu0 0
    %709 = vmatpush1.bf16.xpose.msra.mxu0 %v205
    %710 = vmatprep.subr.bf16.mxu0 0
    %711 = vmatpush1.bf16.xpose.msra.mxu0 0
    %712 = vmatprep.subr.bf16.mxu0 0
    %713 = vmatpush1.bf16.xpose.msra.mxu0 0
    %714 = vmatprep.subr.bf16.mxu0 0
    %715 = vmatpush1.bf16.xpose.msra.mxu0 0
    %716 = vmatprep.subr.bf16.mxu0 0
    %717 = vmatpush1.bf16.xpose.msra.mxu0 0
    %718 = vmatprep.subr.bf16.mxu0 0
    %719 = vmatpush1.bf16.xpose.msra.mxu0 0
    %720 = vmatprep.subr.bf16.mxu0 0
    %721 = vmatpush1.bf16.xpose.msra.mxu0 0
    %722 = vmatprep.subr.bf16.mxu0 0
    %723 = vmatpush1.bf16.xpose.msra.mxu0 0
    %724 = vmatprep.subr.bf16.mxu0 0
    %725 = vmatpush1.bf16.xpose.msra.mxu0 0
    %726 = vmatprep.subr.bf16.mxu0 0
    %727 = vmatpush1.bf16.xpose.msra.mxu0 0
    %728 = vmatprep.subr.bf16.mxu0 0
    %729 = vmatpush1.bf16.xpose.msra.mxu0 0
    %730 = vmatprep.subr.bf16.mxu0 0
    %731 = vmatpush1.bf16.xpose.msra.mxu0 0
    %732 = vmatprep.subr.bf16.mxu0 0
    %733 = vmatpush1.bf16.xpose.msra.mxu0 0
    %734 = vmatprep.subr.bf16.mxu0 0
    %735 = vmatpush1.bf16.xpose.msra.mxu0 0
    %736 = vmatprep.subr.bf16.mxu0 0
    %737 = vmatpush1.bf16.xpose.msra.mxu0 0
    %738 = vmatprep.mubr.bf16.mxu0 0
    %739 = vmatmul.mubr.bf16.gmra.mrb[0].mxu0 %v704
    %v740 = vpop.f32.mrb[0].mxu0
    %v741 = vadd.f32 0.0, %v740
    %v742 = vpop.f32.mrb[0].mxu0
    %v743 = vpop.f32.mrb[0].mxu0
    %v744 = vpop.f32.mrb[0].mxu0
    %745 = vdwg.mxu0
    %v746 = vmul.f32 %v741, 0.17677669
    %v747 = vpack.c.bf16 %v746, %v746
    %s748 = scalar_lea.vmem [#allocation2], 4
    %v749 = vld [vmem:[%s748] sm:$0xf]
    %v751 = vsel %vm250, %v747, 0
    %v754 = vsel %vm250, %v749, 0
    %756 = vmatprep.subr.bf16.mxu0 0
    %757 = vmatpush1.bf16.xpose.msra.mxu0 %v754
    %758 = vmatprep.subr.bf16.mxu0 0
    %759 = vmatpush1.bf16.xpose.msra.mxu0 0
    %760 = vmatprep.subr.bf16.mxu0 0
    %761 = vmatpush1.bf16.xpose.msra.mxu0 0
    %762 = vmatprep.subr.bf16.mxu0 0
    %763 = vmatpush1.bf16.xpose.msra.mxu0 0
    %764 = vmatprep.subr.bf16.mxu0 0
    %765 = vmatpush1.bf16.xpose.msra.mxu0 0
    %766 = vmatprep.subr.bf16.mxu0 0
    %767 = vmatpush1.bf16.xpose.msra.mxu0 0
    %768 = vmatprep.subr.bf16.mxu0 0
    %769 = vmatpush1.bf16.xpose.msra.mxu0 0
    %770 = vmatprep.subr.bf16.mxu0 0
    %771 = vmatpush1.bf16.xpose.msra.mxu0 0
    %772 = vmatprep.subr.bf16.mxu0 0
    %773 = vmatpush1.bf16.xpose.msra.mxu0 0
    %774 = vmatprep.subr.bf16.mxu0 0
    %775 = vmatpush1.bf16.xpose.msra.mxu0 0
    %776 = vmatprep.subr.bf16.mxu0 0
    %777 = vmatpush1.bf16.xpose.msra.mxu0 0
    %778 = vmatprep.subr.bf16.mxu0 0
    %779 = vmatpush1.bf16.xpose.msra.mxu0 0
    %780 = vmatprep.subr.bf16.mxu0 0
    %781 = vmatpush1.bf16.xpose.msra.mxu0 0
    %782 = vmatprep.subr.bf16.mxu0 0
    %783 = vmatpush1.bf16.xpose.msra.mxu0 0
    %784 = vmatprep.subr.bf16.mxu0 0
    %785 = vmatpush1.bf16.xpose.msra.mxu0 0
    %786 = vmatprep.subr.bf16.mxu0 0
    %787 = vmatpush1.bf16.xpose.msra.mxu0 0
    %788 = vmatprep.mubr.bf16.mxu0 0
    %789 = vmatmul.mubr.bf16.gmra.mrb[0].mxu0 %v751
    %v790 = vpop.f32.mrb[0].mxu0
    %v791 = vadd.f32 0.0, %v790
    %v792 = vpop.f32.mrb[0].mxu0
    %v793 = vpop.f32.mrb[0].mxu0
    %v794 = vpop.f32.mrb[0].mxu0
    %795 = vdwg.mxu0
    %v796 = vsel %vm250, %v791, -inf
    %797 = vmax.xlane.f32.xlu0 %v796
    %v798 = vpop.xlane.xlu0 %797
    %v799 = vsub.f32 %v791, %v798
    %v800 = vmul.f32 %v799, 1.442695
    %v801 = vpow.pop %v800
    %v802 = vsel %vm250, %v801, 0.0
    %803 = vadd.xlane.f32.xlu0 %v802
    %v804 = vpop.xlane.xlu0 %803
    %v805 = vrcp.pop %v804
    %v806 = vmul.f32 %v801, %v805
    %v807 = vpack.c.bf16 %v806, %v806
    %v809 = vsel %vm250, %v807, 0
    %v811 = vsel %vm312, %v749, 0
    %813 = vmatprep.subr.bf16.mxu0 0
    %814 = vmatpush1.bf16.msra.mxu0 %v811
    %815 = vmatprep.subr.bf16.mxu0 0
    %816 = vmatpush1.bf16.msra.mxu0 0
    %817 = vmatprep.subr.bf16.mxu0 0
    %818 = vmatpush1.bf16.msra.mxu0 0
    %819 = vmatprep.subr.bf16.mxu0 0
    %820 = vmatpush1.bf16.msra.mxu0 0
    %821 = vmatprep.subr.bf16.mxu0 0
    %822 = vmatpush1.bf16.msra.mxu0 0
    %823 = vmatprep.subr.bf16.mxu0 0
    %824 = vmatpush1.bf16.msra.mxu0 0
    %825 = vmatprep.subr.bf16.mxu0 0
    %826 = vmatpush1.bf16.msra.mxu0 0
    %827 = vmatprep.subr.bf16.mxu0 0
    %828 = vmatpush1.bf16.msra.mxu0 0
    %829 = vmatprep.subr.bf16.mxu0 0
    %830 = vmatpush1.bf16.msra.mxu0 0
    %831 = vmatprep.subr.bf16.mxu0 0
    %832 = vmatpush1.bf16.msra.mxu0 0
    %833 = vmatprep.subr.bf16.mxu0 0
    %834 = vmatpush1.bf16.msra.mxu0 0
    %835 = vmatprep.subr.bf16.mxu0 0
    %836 = vmatpush1.bf16.msra.mxu0 0
    %837 = vmatprep.subr.bf16.mxu0 0
    %838 = vmatpush1.bf16.msra.mxu0 0
    %839 = vmatprep.subr.bf16.mxu0 0
    %840 = vmatpush1.bf16.msra.mxu0 0
    %841 = vmatprep.subr.bf16.mxu0 0
    %842 = vmatpush1.bf16.msra.mxu0 0
    %843 = vmatprep.subr.bf16.mxu0 0
    %844 = vmatpush1.bf16.msra.mxu0 0
    %845 = vmatprep.mubr.bf16.mxu0 0
    %846 = vmatmul.mubr.bf16.gmra.mrb[0].mxu0 %v809
    %v847 = vpop.f32.mrb[0].mxu0
    %v848 = vadd.f32 0.0, %v847
    %v849 = vpop.f32.mrb[0].mxu0
    %v850 = vpop.f32.mrb[0].mxu0
    %v851 = vpop.f32.mrb[0].mxu0
    %852 = vdwg.mxu0
    %s853 = scalar_lea.vmem [#allocation9], 8
    %854 = vst.msk [vmem:[%s853] sm:$0xff] %vm250, %v848
    %856 = vrot.lane.b32.xlu0 %v747, 120
    %v857 = vpop.permute.xlu0 %856
    %v859 = vunpack.c.l.b16 %v749
    %v860 = vpack.c.b16 %v859, %v859
    %861 = vrot.lane.b32.xlu0 %v860, 120
    %v862 = vpop.permute.xlu0 %861
    %v864 = vsel %vm250, %v857, 0
    %v867 = vsel %vm250, %v862, 0
    %869 = vmatprep.subr.bf16.mxu0 0
    %870 = vmatpush1.bf16.xpose.msra.mxu0 %v867
    %871 = vmatprep.subr.bf16.mxu0 0
    %872 = vmatpush1.bf16.xpose.msra.mxu0 0
    %873 = vmatprep.subr.bf16.mxu0 0
    %874 = vmatpush1.bf16.xpose.msra.mxu0 0
    %875 = vmatprep.subr.bf16.mxu0 0
    %876 = vmatpush1.bf16.xpose.msra.mxu0 0
    %877 = vmatprep.subr.bf16.mxu0 0
    %878 = vmatpush1.bf16.xpose.msra.mxu0 0
    %879 = vmatprep.subr.bf16.mxu0 0
    %880 = vmatpush1.bf16.xpose.msra.mxu0 0
    %881 = vmatprep.subr.bf16.mxu0 0
    %882 = vmatpush1.bf16.xpose.msra.mxu0 0
    %883 = vmatprep.subr.bf16.mxu0 0
    %884 = vmatpush1.bf16.xpose.msra.mxu0 0
    %885 = vmatprep.subr.bf16.mxu0 0
    %886 = vmatpush1.bf16.xpose.msra.mxu0 0
    %887 = vmatprep.subr.bf16.mxu0 0
    %888 = vmatpush1.bf16.xpose.msra.mxu0 0
    %889 = vmatprep.subr.bf16.mxu0 0
    %890 = vmatpush1.bf16.xpose.msra.mxu0 0
    %891 = vmatprep.subr.bf16.mxu0 0
    %892 = vmatpush1.bf16.xpose.msra.mxu0 0
    %893 = vmatprep.subr.bf16.mxu0 0
    %894 = vmatpush1.bf16.xpose.msra.mxu0 0
    %895 = vmatprep.subr.bf16.mxu0 0
    %896 = vmatpush1.bf16.xpose.msra.mxu0 0
    %897 = vmatprep.subr.bf16.mxu0 0
    %898 = vmatpush1.bf16.xpose.msra.mxu0 0
    %899 = vmatprep.subr.bf16.mxu0 0
    %900 = vmatpush1.bf16.xpose.msra.mxu0 0
    %901 = vmatprep.mubr.bf16.mxu0 0
    %902 = vmatmul.mubr.bf16.gmra.mrb[0].mxu0 %v864
    %v903 = vpop.f32.mrb[0].mxu0
    %v904 = vadd.f32 0.0, %v903
    %v905 = vpop.f32.mrb[0].mxu0
    %v906 = vpop.f32.mrb[0].mxu0
    %v907 = vpop.f32.mrb[0].mxu0
    %908 = vdwg.mxu0
    %v909 = vsel %vm250, %v904, -inf
    %910 = vmax.xlane.f32.xlu0 %v909
    %v911 = vpop.xlane.xlu0 %910
    %v912 = vsub.f32 %v904, %v911
    %v913 = vmul.f32 %v912, 1.442695
    %v914 = vpow.pop %v913
    %v915 = vsel %vm250, %v914, 0.0
    %916 = vadd.xlane.f32.xlu0 %v915
    %v917 = vpop.xlane.xlu0 %916
    %v918 = vrcp.pop %v917
    %v919 = vmul.f32 %v914, %v918
    %v920 = vpack.c.bf16 %v919, %v919
    %v922 = vsel %vm250, %v920, 0
    %v924 = vsel %vm312, %v862, 0
    %926 = vmatprep.subr.bf16.mxu0 0
    %927 = vmatpush1.bf16.msra.mxu0 %v924
    %928 = vmatprep.subr.bf16.mxu0 0
    %929 = vmatpush1.bf16.msra.mxu0 0
    %930 = vmatprep.subr.bf16.mxu0 0
    %931 = vmatpush1.bf16.msra.mxu0 0
    %932 = vmatprep.subr.bf16.mxu0 0
    %933 = vmatpush1.bf16.msra.mxu0 0
    %934 = vmatprep.subr.bf16.mxu0 0
    %935 = vmatpush1.bf16.msra.mxu0 0
    %936 = vmatprep.subr.bf16.mxu0 0
    %937 = vmatpush1.bf16.msra.mxu0 0
    %938 = vmatprep.subr.bf16.mxu0 0
    %939 = vmatpush1.bf16.msra.mxu0 0
    %940 = vmatprep.subr.bf16.mxu0 0
    %941 = vmatpush1.bf16.msra.mxu0 0
    %942 = vmatprep.subr.bf16.mxu0 0
    %943 = vmatpush1.bf16.msra.mxu0 0
    %944 = vmatprep.subr.bf16.mxu0 0
    %945 = vmatpush1.bf16.msra.mxu0 0
    %946 = vmatprep.subr.bf16.mxu0 0
    %947 = vmatpush1.bf16.msra.mxu0 0
    %948 = vmatprep.subr.bf16.mxu0 0
    %949 = vmatpush1.bf16.msra.mxu0 0
    %950 = vmatprep.subr.bf16.mxu0 0
    %951 = vmatpush1.bf16.msra.mxu0 0
    %952 = vmatprep.subr.bf16.mxu0 0
    %953 = vmatpush1.bf16.msra.mxu0 0
    %954 = vmatprep.subr.bf16.mxu0 0
    %955 = vmatpush1.bf16.msra.mxu0 0
    %956 = vmatprep.subr.bf16.mxu0 0
    %957 = vmatpush1.bf16.msra.mxu0 0
    %958 = vmatprep.mubr.bf16.mxu0 0
    %959 = vmatmul.mubr.bf16.gmra.mrb[0].mxu0 %v922
    %v960 = vpop.f32.mrb[0].mxu0
    %v961 = vadd.f32 0.0, %v960
    %v962 = vpop.f32.mrb[0].mxu0
    %v963 = vpop.f32.mrb[0].mxu0
    %v964 = vpop.f32.mrb[0].mxu0
    %965 = vdwg.mxu0
    %967 = vrot.lane.b32.xlu0 %v961, 8
    %v968 = vpop.permute.xlu0 %967
    %970 = vst.msk [vmem:[%s853] sm:$0xff] %vm471, %v968
    %971 = vrot.lane.b32.xlu0 %v747, 112
    %v972 = vpop.permute.xlu0 %971
    %973 = vrot.lane.b32.xlu0 %v860, 112
    %v974 = vpop.permute.xlu0 %973
    %v976 = vsel %vm250, %v972, 0
    %v979 = vsel %vm250, %v974, 0
    %981 = vmatprep.subr.bf16.mxu0 0
    %982 = vmatpush1.bf16.xpose.msra.mxu0 %v979
    %983 = vmatprep.subr.bf16.mxu0 0
    %984 = vmatpush1.bf16.xpose.msra.mxu0 0
    %985 = vmatprep.subr.bf16.mxu0 0
    %986 = vmatpush1.bf16.xpose.msra.mxu0 0
    %987 = vmatprep.subr.bf16.mxu0 0
    %988 = vmatpush1.bf16.xpose.msra.mxu0 0
    %989 = vmatprep.subr.bf16.mxu0 0
    %990 = vmatpush1.bf16.xpose.msra.mxu0 0
    %991 = vmatprep.subr.bf16.mxu0 0
    %992 = vmatpush1.bf16.xpose.msra.mxu0 0
    %993 = vmatprep.subr.bf16.mxu0 0
    %994 = vmatpush1.bf16.xpose.msra.mxu0 0
    %995 = vmatprep.subr.bf16.mxu0 0
    %996 = vmatpush1.bf16.xpose.msra.mxu0 0
    %997 = vmatprep.subr.bf16.mxu0 0
    %998 = vmatpush1.bf16.xpose.msra.mxu0 0
    %999 = vmatprep.subr.bf16.mxu0 0
    %1000 = vmatpush1.bf16.xpose.msra.mxu0 0
    %1001 = vmatprep.subr.bf16.mxu0 0
    %1002 = vmatpush1.bf16.xpose.msra.mxu0 0
    %1003 = vmatprep.subr.bf16.mxu0 0
    %1004 = vmatpush1.bf16.xpose.msra.mxu0 0
    %1005 = vmatprep.subr.bf16.mxu0 0
    %1006 = vmatpush1.bf16.xpose.msra.mxu0 0
    %1007 = vmatprep.subr.bf16.mxu0 0
    %1008 = vmatpush1.bf16.xpose.msra.mxu0 0
    %1009 = vmatprep.subr.bf16.mxu0 0
    %1010 = vmatpush1.bf16.xpose.msra.mxu0 0
    %1011 = vmatprep.subr.bf16.mxu0 0
    %1012 = vmatpush1.bf16.xpose.msra.mxu0 0
    %1013 = vmatprep.mubr.bf16.mxu0 0
    %1014 = vmatmul.mubr.bf16.gmra.mrb[0].mxu0 %v976
    %v1015 = vpop.f32.mrb[0].mxu0
    %v1016 = vadd.f32 0.0, %v1015
    %v1017 = vpop.f32.mrb[0].mxu0
    %v1018 = vpop.f32.mrb[0].mxu0
    %v1019 = vpop.f32.mrb[0].mxu0
    %1020 = vdwg.mxu0
    %v1021 = vsel %vm250, %v1016, -inf
    %1022 = vmax.xlane.f32.xlu0 %v1021
    %v1023 = vpop.xlane.xlu0 %1022
    %v1024 = vsub.f32 %v1016, %v1023
    %v1025 = vmul.f32 %v1024, 1.442695
    %v1026 = vpow.pop %v1025
    %v1027 = vsel %vm250, %v1026, 0.0
    %1028 = vadd.xlane.f32.xlu0 %v1027
    %v1029 = vpop.xlane.xlu0 %1028
    %v1030 = vrcp.pop %v1029
    %v1031 = vmul.f32 %v1026, %v1030
    %v1032 = vpack.c.bf16 %v1031, %v1031
    %v1034 = vsel %vm250, %v1032, 0
    %v1036 = vsel %vm312, %v974, 0
    %1038 = vmatprep.subr.bf16.mxu0 0
    %1039 = vmatpush1.bf16.msra.mxu0 %v1036
    %1040 = vmatprep.subr.bf16.mxu0 0
    %1041 = vmatpush1.bf16.msra.mxu0 0
    %1042 = vmatprep.subr.bf16.mxu0 0
    %1043 = vmatpush1.bf16.msra.mxu0 0
    %1044 = vmatprep.subr.bf16.mxu0 0
    %1045 = vmatpush1.bf16.msra.mxu0 0
    %1046 = vmatprep.subr.bf16.mxu0 0
    %1047 = vmatpush1.bf16.msra.mxu0 0
    %1048 = vmatprep.subr.bf16.mxu0 0
    %1049 = vmatpush1.bf16.msra.mxu0 0
    %1050 = vmatprep.subr.bf16.mxu0 0
    %1051 = vmatpush1.bf16.msra.mxu0 0
    %1052 = vmatprep.subr.bf16.mxu0 0
    %1053 = vmatpush1.bf16.msra.mxu0 0
    %1054 = vmatprep.subr.bf16.mxu0 0
    %1055 = vmatpush1.bf16.msra.mxu0 0
    %1056 = vmatprep.subr.bf16.mxu0 0
    %1057 = vmatpush1.bf16.msra.mxu0 0
    %1058 = vmatprep.subr.bf16.mxu0 0
    %1059 = vmatpush1.bf16.msra.mxu0 0
    %1060 = vmatprep.subr.bf16.mxu0 0
    %1061 = vmatpush1.bf16.msra.mxu0 0
    %1062 = vmatprep.subr.bf16.mxu0 0
    %1063 = vmatpush1.bf16.msra.mxu0 0
    %1064 = vmatprep.subr.bf16.mxu0 0
    %1065 = vmatpush1.bf16.msra.mxu0 0
    %1066 = vmatprep.subr.bf16.mxu0 0
    %1067 = vmatpush1.bf16.msra.mxu0 0
    %1068 = vmatprep.subr.bf16.mxu0 0
    %1069 = vmatpush1.bf16.msra.mxu0 0
    %1070 = vmatprep.mubr.bf16.mxu0 0
    %1071 = vmatmul.mubr.bf16.gmra.mrb[0].mxu0 %v1034
    %v1072 = vpop.f32.mrb[0].mxu0
    %v1073 = vadd.f32 0.0, %v1072
    %v1074 = vpop.f32.mrb[0].mxu0
    %v1075 = vpop.f32.mrb[0].mxu0
    %v1076 = vpop.f32.mrb[0].mxu0
    %1077 = vdwg.mxu0
    %1079 = vrot.lane.b32.xlu0 %v1073, 16
    %v1080 = vpop.permute.xlu0 %1079
    %1082 = vst.msk [vmem:[%s853] sm:$0xff] %vm584, %v1080
    %1083 = vrot.lane.b32.xlu0 %v747, 104
    %v1084 = vpop.permute.xlu0 %1083
    %1085 = vrot.lane.b32.xlu0 %v860, 104
    %v1086 = vpop.permute.xlu0 %1085
    %v1088 = vsel %vm250, %v1084, 0
    %v1091 = vsel %vm250, %v1086, 0
    %1093 = vmatprep.subr.bf16.mxu0 0
    %1094 = vmatpush1.bf16.xpose.msra.mxu0 %v1091
    %1095 = vmatprep.subr.bf16.mxu0 0
    %1096 = vmatpush1.bf16.xpose.msra.mxu0 0
    %1097 = vmatprep.subr.bf16.mxu0 0
    %1098 = vmatpush1.bf16.xpose.msra.mxu0 0
    %1099 = vmatprep.subr.bf16.mxu0 0
    %1100 = vmatpush1.bf16.xpose.msra.mxu0 0
    %1101 = vmatprep.subr.bf16.mxu0 0
    %1102 = vmatpush1.bf16.xpose.msra.mxu0 0
    %1103 = vmatprep.subr.bf16.mxu0 0
    %1104 = vmatpush1.bf16.xpose.msra.mxu0 0
    %1105 = vmatprep.subr.bf16.mxu0 0
    %1106 = vmatpush1.bf16.xpose.msra.mxu0 0
    %1107 = vmatprep.subr.bf16.mxu0 0
    %1108 = vmatpush1.bf16.xpose.msra.mxu0 0
    %1109 = vmatprep.subr.bf16.mxu0 0
    %1110 = vmatpush1.bf16.xpose.msra.mxu0 0
    %1111 = vmatprep.subr.bf16.mxu0 0
    %1112 = vmatpush1.bf16.xpose.msra.mxu0 0
    %1113 = vmatprep.subr.bf16.mxu0 0
    %1114 = vmatpush1.bf16.xpose.msra.mxu0 0
    %1115 = vmatprep.subr.bf16.mxu0 0
    %1116 = vmatpush1.bf16.xpose.msra.mxu0 0
    %1117 = vmatprep.subr.bf16.mxu0 0
    %1118 = vmatpush1.bf16.xpose.msra.mxu0 0
    %1119 = vmatprep.subr.bf16.mxu0 0
    %1120 = vmatpush1.bf16.xpose.msra.mxu0 0
    %1121 = vmatprep.subr.bf16.mxu0 0
    %1122 = vmatpush1.bf16.xpose.msra.mxu0 0
    %1123 = vmatprep.subr.bf16.mxu0 0
    %1124 = vmatpush1.bf16.xpose.msra.mxu0 0
    %1125 = vmatprep.mubr.bf16.mxu0 0
    %1126 = vmatmul.mubr.bf16.gmra.mrb[0].mxu0 %v1088
    %v1127 = vpop.f32.mrb[0].mxu0
    %v1128 = vadd.f32 0.0, %v1127
    %v1129 = vpop.f32.mrb[0].mxu0
    %v1130 = vpop.f32.mrb[0].mxu0
    %v1131 = vpop.f32.mrb[0].mxu0
    %1132 = vdwg.mxu0
    %v1133 = vsel %vm250, %v1128, -inf
    %1134 = vmax.xlane.f32.xlu0 %v1133
    %v1135 = vpop.xlane.xlu0 %1134
    %v1136 = vsub.f32 %v1128, %v1135
    %v1137 = vmul.f32 %v1136, 1.442695
    %v1138 = vpow.pop %v1137
    %v1139 = vsel %vm250, %v1138, 0.0
    %1140 = vadd.xlane.f32.xlu0 %v1139
    %v1141 = vpop.xlane.xlu0 %1140
    %v1142 = vrcp.pop %v1141
    %v1143 = vmul.f32 %v1138, %v1142
    %v1144 = vpack.c.bf16 %v1143, %v1143
    %v1146 = vsel %vm250, %v1144, 0
    %v1148 = vsel %vm312, %v1086, 0
    %1150 = vmatprep.subr.bf16.mxu0 0
    %1151 = vmatpush1.bf16.msra.mxu0 %v1148
    %1152 = vmatprep.subr.bf16.mxu0 0
    %1153 = vmatpush1.bf16.msra.mxu0 0
    %1154 = vmatprep.subr.bf16.mxu0 0
    %1155 = vmatpush1.bf16.msra.mxu0 0
    %1156 = vmatprep.subr.bf16.mxu0 0
    %1157 = vmatpush1.bf16.msra.mxu0 0
    %1158 = vmatprep.subr.bf16.mxu0 0
    %1159 = vmatpush1.bf16.msra.mxu0 0
    %1160 = vmatprep.subr.bf16.mxu0 0
    %1161 = vmatpush1.bf16.msra.mxu0 0
    %1162 = vmatprep.subr.bf16.mxu0 0
    %1163 = vmatpush1.bf16.msra.mxu0 0
    %1164 = vmatprep.subr.bf16.mxu0 0
    %1165 = vmatpush1.bf16.msra.mxu0 0
    %1166 = vmatprep.subr.bf16.mxu0 0
    %1167 = vmatpush1.bf16.msra.mxu0 0
    %1168 = vmatprep.subr.bf16.mxu0 0
    %1169 = vmatpush1.bf16.msra.mxu0 0
    %1170 = vmatprep.subr.bf16.mxu0 0
    %1171 = vmatpush1.bf16.msra.mxu0 0
    %1172 = vmatprep.subr.bf16.mxu0 0
    %1173 = vmatpush1.bf16.msra.mxu0 0
    %1174 = vmatprep.subr.bf16.mxu0 0
    %1175 = vmatpush1.bf16.msra.mxu0 0
    %1176 = vmatprep.subr.bf16.mxu0 0
    %1177 = vmatpush1.bf16.msra.mxu0 0
    %1178 = vmatprep.subr.bf16.mxu0 0
    %1179 = vmatpush1.bf16.msra.mxu0 0
    %1180 = vmatprep.subr.bf16.mxu0 0
    %1181 = vmatpush1.bf16.msra.mxu0 0
    %1182 = vmatprep.mubr.bf16.mxu0 0
    %1183 = vmatmul.mubr.bf16.gmra.mrb[0].mxu0 %v1146
    %v1184 = vpop.f32.mrb[0].mxu0
    %v1185 = vadd.f32 0.0, %v1184
    %v1186 = vpop.f32.mrb[0].mxu0
    %v1187 = vpop.f32.mrb[0].mxu0
    %v1188 = vpop.f32.mrb[0].mxu0
    %1189 = vdwg.mxu0
    %1191 = vrot.lane.b32.xlu0 %v1185, 24
    %v1192 = vpop.permute.xlu0 %1191
    %1194 = vst.msk [vmem:[%s853] sm:$0xff] %vm697, %v1192
    // Predicated region
    $region30: #{tpu_custom_call.1} parent=1 // pred_check
      _
    $region31: #{tpu_custom_call.1} parent=1 // pred_check_branch
      %1196 = sbr.rel (0) target = $region33
    $region32: #{tpu_custom_call.1} parent=1 // pred_region
      %s1198 = ssub.s32 256, 256
      %1199 = vsyncadd [#allocation5], %s1198
      %s1200 = sshll.u32 [#allocation9], 4
      %s1201 = int_to_ptr.vmem [resolvable:$true] %s1200
      %1206 = dma.vmem_to_hbm [thread:$0]  %s1201, 256, %s3, [#allocation5], 128, 128, 8
    $region33: #{tpu_custom_call.1} parent=1 // pred_fallthru
      _
    // Predicated region
    $region34: #{tpu_custom_call.1} parent=1 // pred_check
      _
    $region35: #{tpu_custom_call.1} parent=1 // pred_check_branch
      %1208 = sbr.rel (0) target = $region37
    $region36: #{tpu_custom_call.1} parent=1 // pred_region
      %1209 = dma.done [#allocation5], 256
    $region37: #{tpu_custom_call.1} parent=1 // pred_fallthru
      _
    %1210 = vsyncpa [#allocation4], 1
    %1211 = vsyncpa [#allocation7], 1
    %1212 = vsyncpa [#allocation5], 1

</llo_original>
